<compile_context>
chip_gen: v6e
topology: v6e:2x2x1
jax: 0.10.0
libtpu: 0.0.40
codegen_flags: <defaults>
</compile_context>

<pallas_src>
import functools

import jax
import jax.numpy as jnp
import numpy as np
from jax.experimental import pallas as pl
from jax.experimental.pallas import tpu as pltpu


def _layernorm(x, w, b, eps, n):
    # matches torch reference: mean + unbiased variance (N-1) over last dim, affine.
    mean = jnp.mean(x, axis=-1, keepdims=True)
    d = x - mean
    var = jnp.sum(d * d, axis=-1, keepdims=True) * (1.0 / (n - 1))
    return d * jax.lax.rsqrt(var + eps) * w + b          # rsqrt -> EUP, no VALU divide


# -----------------------------------------------------------------------------------
# Kernel 1: LayerNorm1 + qkv projection (bf16 MXU operands, fp32 accumulation)
# -----------------------------------------------------------------------------------
def ln_qkv_kernel(x_ref, ln1w_ref, ln1b_ref, wattn_ref, q_ref, k_ref, v_ref, *, eps):
    x = x_ref[...]                                        # (Tt, C) f32
    C = x.shape[-1]
    h = _layernorm(x, ln1w_ref[...], ln1b_ref[...], eps, C).astype(jnp.bfloat16)
    qkv = jnp.dot(h, wattn_ref[...], preferred_element_type=jnp.float32)  # (Tt, 3C) f32
    q_ref[...] = qkv[:, 0 * C:1 * C].astype(q_ref.dtype)
    k_ref[...] = qkv[:, 1 * C:2 * C].astype(k_ref.dtype)
    v_ref[...] = qkv[:, 2 * C:3 * C].astype(v_ref.dtype)


# -----------------------------------------------------------------------------------
# Kernel 2: flash causal attention + c_proj + residual + LN2 + SwiGeLU MLP + residual
# -----------------------------------------------------------------------------------
def attn_mlp_kernel(x_ref, q_ref, k_ref, v_ref, wproj_ref, ln2w_ref, ln2b_ref,
                    wfc1_ref, bfc1_ref, wfc2_ref, bfc2_ref, o_ref,
                    m_scr, l_scr, acc_scr, *, n_head, eps):
    qi = pl.program_id(1)
    ki = pl.program_id(2)
    H, Tq, D = q_ref.shape
    Tk = k_ref.shape[1]
    C = H * D
    scale = 1.0 / (D ** 0.5)

    @pl.when(ki == 0)
    def _init():
        m_scr[...] = jnp.full(m_scr.shape, -jnp.inf, dtype=m_scr.dtype)
        l_scr[...] = jnp.zeros(l_scr.shape, dtype=l_scr.dtype)
        acc_scr[...] = jnp.zeros(acc_scr.shape, dtype=acc_scr.dtype)

    @pl.when(ki <= qi)   # causal: kv blocks strictly above the diagonal are skipped
    def _online_softmax_step():
        q = q_ref[...]   # (H, Tq, D) bf16
        k = k_ref[...]   # (H, Tk, D) bf16
        v = v_ref[...]   # (H, Tk, D) bf16
        s = jnp.einsum("hqd,hkd->hqk", q, k,
                       preferred_element_type=jnp.float32) * scale        # (H, Tq, Tk)
        row = qi * Tq + jax.lax.broadcasted_iota(jnp.int32, (Tq, Tk), 0)   # global q idx
        col = ki * Tk + jax.lax.broadcasted_iota(jnp.int32, (Tq, Tk), 1)   # global k idx
        s = jnp.where((row >= col)[None, :, :], s, -1e30)
        m_prev = m_scr[...]
        m_new = jnp.maximum(m_prev, jnp.max(s, axis=-1, keepdims=True))
        alpha = jnp.exp(m_prev - m_new)
        p = jnp.exp(s - m_new)
        l_scr[...] = alpha * l_scr[...] + jnp.sum(p, axis=-1, keepdims=True)
        acc_scr[...] = alpha * acc_scr[...] + jnp.einsum(
            "hqk,hkd->hqd", p.astype(jnp.bfloat16), v,
            preferred_element_type=jnp.float32)
        m_scr[...] = m_new

    @pl.when(ki == qi)   # diagonal block == last computed kv block for this q tile
    def _finalize_block():
        x = x_ref[...]                                                    # (Tq, C) f32
        o = (acc_scr[...] * pl.reciprocal(l_scr[...], approx=True)
             ).astype(jnp.bfloat16)                                       # (H, Tq, D)
        # c_proj fused per head:  sum_h o[h] @ Wproj[h]  ==  concat_h(o[h]) @ Wproj
        attn = jnp.zeros((Tq, C), jnp.float32)
        for h in range(n_head):                                           # finalize-only
            attn = attn + jnp.dot(o[h], wproj_ref[h],
                                  preferred_element_type=jnp.float32)
        x1 = x + attn                                                     # residual 1
        h2 = _layernorm(x1, ln2w_ref[...], ln2b_ref[...], eps, C).astype(jnp.bfloat16)
        f1 = jnp.dot(h2, wfc1_ref[...],
                     preferred_element_type=jnp.float32) + bfc1_ref[...]  # (Tq, 4C) f32
        f1 = f1 * jax.nn.sigmoid(1.702 * f1)                              # SwiGeLU (fp32)
        f2 = jnp.dot(f1.astype(jnp.bfloat16), wfc2_ref[...],
                     preferred_element_type=jnp.float32) + bfc2_ref[...]
        o_ref[...] = (x1 + f2).astype(o_ref.dtype)                        # residual 2


def _pick_tile(T, target):
    """Largest multiple of 8 that divides T and is <= target; else the full T."""
    cand = (min(target, T) // 8) * 8
    while cand >= 8:
        if T % cand == 0:
            return cand
        cand -= 8
    return T


def _nanogpt_block_impl(x, params, *, n_head, eps=1e-5, block_t_target=256,
                        vmem_limit_bytes=None):
    (ln1w, ln1b, w_attn, w_proj, ln2w, ln2b,
     w_fc1, b_fc1, w_fc2, b_fc2) = params
    B, T, C = x.shape
    assert C % n_head == 0
    D = C // n_head
    bt = _pick_tile(T, block_t_target)     # small on v7x (64 MiB VMEM), bigger on v5e/v6e
    n_t = T // bt

    f32, bf16 = jnp.float32, jnp.bfloat16
    x = x.astype(f32)
    # bf16 MXU operands (fp32 accumulation happens inside the kernels)
    w_attn_b = w_attn.astype(bf16)
    w_proj_b = w_proj.astype(bf16).reshape(n_head, D, C)    # head-major proj rows
    w_fc1_b = w_fc1.astype(bf16)
    w_fc2_b = w_fc2.astype(bf16)
    ln1w, ln1b = ln1w.astype(f32), ln1b.astype(f32)
    ln2w, ln2b = ln2w.astype(f32), ln2b.astype(f32)
    b_fc1, b_fc2 = b_fc1.astype(f32), b_fc2.astype(f32)

    cp_extra = {} if vmem_limit_bytes is None else dict(vmem_limit_bytes=vmem_limit_bytes)

    # ------------------------ kernel 1: LN1 + qkv ------------------------
    q, k, v = pl.pallas_call(
        functools.partial(ln_qkv_kernel, eps=eps),
        out_shape=[jax.ShapeDtypeStruct((B, T, C), bf16)] * 3,
        grid_spec=pltpu.PrefetchScalarGridSpec(
            num_scalar_prefetch=0,
            grid=(B, n_t),
            in_specs=[
                pl.BlockSpec((None, bt, C), lambda b, i: (b, i, 0)),
                pl.BlockSpec((1, C), lambda b, i: (0, 0)),
                pl.BlockSpec((1, C), lambda b, i: (0, 0)),
                pl.BlockSpec((C, 3 * C), lambda b, i: (0, 0)),
            ],
            out_specs=[pl.BlockSpec((None, bt, C), lambda b, i: (b, i, 0))] * 3,
        ),
        compiler_params=pltpu.CompilerParams(
            dimension_semantics=("parallel", "parallel"), **cp_extra),
        cost_estimate=pl.CostEstimate(
            flops=2 * B * T * C * 3 * C,
            transcendentals=B * T,
            bytes_accessed=B * T * C * 4 + 3 * C * C * 2 + 3 * B * T * C * 2),
    )(x, ln1w, ln1b, w_attn_b)

    # Layout plumbing outside the kernel: (B, T, C) -> (B, H, T, D) head-major so the
    # attention kernel needs no in-kernel reshapes/relayouts.
    # TODO(synk): this transpose could be folded into kernel 1 to save one HBM round-trip.
    def to_heads(t):
        return t.reshape(B, T, n_head, D).transpose(0, 2, 1, 3)
    qh, kh, vh = to_heads(q), to_heads(k), to_heads(v)

    # ------------- kernel 2: flash attention + proj + LN2 + MLP -------------
    flops2 = B * (4 * T * T * C + 2 * T * C * C + 16 * T * C * C)
    trans2 = B * n_head * T * T + 4 * B * T * C
    bytes2 = 2 * B * T * C * 4 + 3 * B * T * C * 2 + 9 * C * C * 2 + 7 * C * 4

    out = pl.pallas_call(
        functools.partial(attn_mlp_kernel, n_head=n_head, eps=eps),
        out_shape=jax.ShapeDtypeStruct((B, T, C), x.dtype),
        grid_spec=pltpu.PrefetchScalarGridSpec(
            num_scalar_prefetch=0,
            grid=(B, n_t, n_t),
            in_specs=[
                pl.BlockSpec((None, bt, C), lambda b, qi, ki: (b, qi, 0)),        # x
                pl.BlockSpec((None, n_head, bt, D),
                             lambda b, qi, ki: (b, 0, qi, 0)),                    # q
                pl.BlockSpec((None, n_head, bt, D),
                             lambda b, qi, ki: (b, 0, jnp.minimum(ki, qi), 0)),   # k
                pl.BlockSpec((None, n_head, bt, D),
                             lambda b, qi, ki: (b, 0, jnp.minimum(ki, qi), 0)),   # v
                pl.BlockSpec((n_head, D, C), lambda b, qi, ki: (0, 0, 0)),        # w_proj
                pl.BlockSpec((1, C), lambda b, qi, ki: (0, 0)),                   # ln2 w
                pl.BlockSpec((1, C), lambda b, qi, ki: (0, 0)),                   # ln2 b
                pl.BlockSpec((C, 4 * C), lambda b, qi, ki: (0, 0)),               # fc1 w
                pl.BlockSpec((1, 4 * C), lambda b, qi, ki: (0, 0)),               # fc1 b
                pl.BlockSpec((4 * C, C), lambda b, qi, ki: (0, 0)),               # fc2 w
                pl.BlockSpec((1, C), lambda b, qi, ki: (0, 0)),                   # fc2 b
            ],
            out_specs=pl.BlockSpec((None, bt, C), lambda b, qi, ki: (b, qi, 0)),
            scratch_shapes=[
                pltpu.VMEM((n_head, bt, 1), jnp.float32),   # running row-max m
                pltpu.VMEM((n_head, bt, 1), jnp.float32),   # running denom l
                pltpu.VMEM((n_head, bt, D), jnp.float32),   # output accumulator
            ],
        ),
        compiler_params=pltpu.CompilerParams(
            dimension_semantics=("parallel", "parallel", "arbitrary"), **cp_extra),
        cost_estimate=pl.CostEstimate(
            flops=flops2, transcendentals=trans2, bytes_accessed=bytes2),
    )(x, qh, kh, vh, w_proj_b, ln2w, ln2b, w_fc1_b, b_fc1, w_fc2_b, b_fc2)
    return out


nanogpt_block = jax.jit(
    _nanogpt_block_impl,
    static_argnames=("n_head", "eps", "block_t_target", "vmem_limit_bytes"))


# ---------------- pure-JAX fp32 reference for correctness checking ----------------
def ref_block(x, params, n_head, eps=1e-5):
    ln1w, ln1b, w_attn, w_proj, ln2w, ln2b, w_fc1, b_fc1, w_fc2, b_fc2 = params
    B, T, C = x.shape
    D = C // n_head

    def ln(z, w, b):
        mean = z.mean(-1, keepdims=True)
        var = jnp.var(z, axis=-1, ddof=1, keepdims=True)
        return (z - mean) / jnp.sqrt(var + eps) * w + b

    h = ln(x, ln1w, ln1b)
    qkv = h @ w_attn
    q, k, v = jnp.split(qkv, 3, axis=-1)
    q = q.reshape(B, T, n_head, D).transpose(0, 2, 1, 3)
    k = k.reshape(B, T, n_head, D).transpose(0, 2, 1, 3)
    v = v.reshape(B, T, n_head, D).transpose(0, 2, 1, 3)
    s = jnp.einsum("bhtd,bhsd->bhts", q, k) / jnp.sqrt(D)
    mask = jnp.tril(jnp.ones((T, T), bool))
    s = jnp.where(mask, s, -1e30)
    p = jax.nn.softmax(s, axis=-1)
    o = jnp.einsum("bhts,bhsd->bhtd", p, v).transpose(0, 2, 1, 3).reshape(B, T, C)
    x = x + o @ w_proj

    h2 = ln(x, ln2w, ln2b)
    f1 = h2 @ w_fc1 + b_fc1
    f1 = f1 * jax.nn.sigmoid(1.702 * f1)
    return x + f1 @ w_fc2 + b_fc2


if __name__ == "__main__":
    def make_params(key, C):
        keys = jax.random.split(key, 6)
        ln1w = jnp.ones((1, C), jnp.float32)
        ln1b = jnp.zeros((1, C), jnp.float32)
        ln2w = jnp.ones((1, C), jnp.float32)
        ln2b = jnp.zeros((1, C), jnp.float32)
        w_attn = 0.02 * jax.random.normal(keys[0], (C, 3 * C), jnp.float32)
        w_proj = 0.02 * jax.random.normal(keys[1], (C, C), jnp.float32)
        w_fc1 = 0.02 * jax.random.normal(keys[2], (C, 4 * C), jnp.float32)
        b_fc1 = 0.02 * jax.random.normal(keys[3], (1, 4 * C), jnp.float32)
        w_fc2 = 0.02 * jax.random.normal(keys[4], (4 * C, C), jnp.float32)
        b_fc2 = 0.02 * jax.random.normal(keys[5], (1, C), jnp.float32)
        return (ln1w, ln1b, w_attn, w_proj, ln2w, ln2b, w_fc1, b_fc1, w_fc2, b_fc2)

    key = jax.random.PRNGKey(0)
    k1, k2, k3, k4 = jax.random.split(key, 4)

    # Test 1: tiny nanoGPT-like shapes (single tile path): B=2, T=8, C=32, H=4
    B, T, C, H = 2, 8, 32, 4
    x = jax.random.normal(k1, (B, T, C), jnp.float32)
    params = make_params(k2, C)
    out = jax.block_until_ready(nanogpt_block(x, params, n_head=H))
    ref = ref_block(x, params, H)
    assert out.shape == (B, T, C)
    np.testing.assert_allclose(np.asarray(out), np.asarray(ref), rtol=2e-2, atol=2e-2)

    # Test 2: exercises the flash / causal-block-skip tiling path (2 q-tiles x 2 kv-tiles)
    B, T, C, H = 1, 32, 128, 4
    x = jax.random.normal(k3, (B, T, C), jnp.float32)
    params = make_params(k4, C)
    out = jax.block_until_ready(
        nanogpt_block(x, params, n_head=H, block_t_target=16))
    ref = ref_block(x, params, H)
    np.testing.assert_allclose(np.asarray(out), np.asarray(ref), rtol=2e-2, atol=2e-2)

    print("KERNEL_OK")
</pallas_src>

<mosaic_0001>
module attributes {stable_mosaic.version = 11 : i64} {
  func.func @ln_qkv_kernel(%arg0: i32, %arg1: i32, %arg2: memref<1x8x32xf32, #tpu.memory_space<vmem>>, %arg3: memref<1x32xf32, #tpu.memory_space<vmem>>, %arg4: memref<1x32xf32, #tpu.memory_space<vmem>>, %arg5: memref<32x96xbf16, #tpu.memory_space<vmem>>, %arg6: memref<1x8x32xbf16, #tpu.memory_space<vmem>>, %arg7: memref<1x8x32xbf16, #tpu.memory_space<vmem>>, %arg8: memref<1x8x32xbf16, #tpu.memory_space<vmem>>) attributes {dimension_semantics = [#tpu.dimension_semantics<parallel>, #tpu.dimension_semantics<parallel>], iteration_bounds = array<i64: 2, 1>, scalar_prefetch = 0 : i64, scratch_operands = 0 : i64, tpu.core_type = #tpu.core_type<tc>, window_params = [{transform_indices = @transform_0, window_bounds = array<i64: 1, 8, 32>}, {pipeline_mode = #tpu.pipeline_mode<synchronous>, transform_indices = @transform_1, window_bounds = array<i64: 1, 32>}, {pipeline_mode = #tpu.pipeline_mode<synchronous>, transform_indices = @transform_2, window_bounds = array<i64: 1, 32>}, {pipeline_mode = #tpu.pipeline_mode<synchronous>, transform_indices = @transform_3, window_bounds = array<i64: 32, 96>}, {transform_indices = @transform_4, window_bounds = array<i64: 1, 8, 32>}, {transform_indices = @transform_5, window_bounds = array<i64: 1, 8, 32>}, {transform_indices = @transform_6, window_bounds = array<i64: 1, 8, 32>}]} {
    %c0 = arith.constant 0 : index
    %c0_0 = arith.constant 0 : index
    %c0_1 = arith.constant 0 : index
    %0 = vector.load %arg2[%c0, %c0_0, %c0_1] : memref<1x8x32xf32, #tpu.memory_space<vmem>>, vector<1x8x32xf32>
    %1 = vector.shape_cast %0 : vector<1x8x32xf32> to vector<8x32xf32>
    %c0_2 = arith.constant 0 : index
    %c0_3 = arith.constant 0 : index
    %2 = vector.load %arg3[%c0_2, %c0_3] : memref<1x32xf32, #tpu.memory_space<vmem>>, vector<1x32xf32>
    %c0_4 = arith.constant 0 : index
    %c0_5 = arith.constant 0 : index
    %3 = vector.load %arg4[%c0_4, %c0_5] : memref<1x32xf32, #tpu.memory_space<vmem>>, vector<1x32xf32>
    %cst = arith.constant dense<0.000000e+00> : vector<8xf32>
    %4 = vector.multi_reduction <add>, %1, %cst [1] : vector<8x32xf32> to vector<8xf32>
    %5 = vector.shape_cast %4 : vector<8xf32> to vector<8x1xf32>
    %cst_6 = arith.constant 3.200000e+01 : f32
    %6 = vector.broadcast %cst_6 : f32 to vector<8x1xf32>
    %7 = arith.divf %5, %6 : vector<8x1xf32>
    %8 = vector.broadcast %7 : vector<8x1xf32> to vector<8x32xf32>
    %9 = arith.subf %1, %8 : vector<8x32xf32>
    %10 = arith.mulf %9, %9 : vector<8x32xf32>
    %cst_7 = arith.constant dense<0.000000e+00> : vector<8xf32>
    %11 = vector.multi_reduction <add>, %10, %cst_7 [1] : vector<8x32xf32> to vector<8xf32>
    %12 = vector.shape_cast %11 : vector<8xf32> to vector<8x1xf32>
    %cst_8 = arith.constant 0.0322580636 : f32
    %13 = vector.broadcast %cst_8 : f32 to vector<8x1xf32>
    %14 = arith.mulf %12, %13 : vector<8x1xf32>
    %cst_9 = arith.constant 9.99999974E-6 : f32
    %15 = vector.broadcast %cst_9 : f32 to vector<8x1xf32>
    %16 = arith.addf %14, %15 : vector<8x1xf32>
    %17 = math.rsqrt %16 : vector<8x1xf32>
    %18 = vector.broadcast %17 : vector<8x1xf32> to vector<8x32xf32>
    %19 = arith.mulf %9, %18 : vector<8x32xf32>
    %20 = vector.broadcast %2 : vector<1x32xf32> to vector<8x32xf32>
    %21 = arith.mulf %19, %20 : vector<8x32xf32>
    %22 = vector.broadcast %3 : vector<1x32xf32> to vector<8x32xf32>
    %23 = arith.addf %21, %22 : vector<8x32xf32>
    %24 = arith.truncf %23 : vector<8x32xf32> to vector<8x32xbf16>
    %c0_10 = arith.constant 0 : index
    %c0_11 = arith.constant 0 : index
    %25 = vector.load %arg5[%c0_10, %c0_11] : memref<32x96xbf16, #tpu.memory_space<vmem>>, vector<32x96xbf16>
    %cst_12 = arith.constant dense<0.000000e+00> : vector<8x96xf32>
    %26 = tpu.matmul %24, %25, %cst_12 {dimension_numbers = #tpu.dot_dimension_numbers<[1], [0], [0], [1], [0, 0, 1, 1], [], []>} : vector<8x32xbf16>, vector<32x96xbf16>, vector<8x96xf32> -> vector<8x96xf32>
    %27 = vector.extract_strided_slice %26 {offsets = [0, 0], sizes = [8, 32], strides = [1, 1]} : vector<8x96xf32> to vector<8x32xf32>
    %28 = arith.truncf %27 : vector<8x32xf32> to vector<8x32xbf16>
    %c0_13 = arith.constant 0 : index
    %c0_14 = arith.constant 0 : index
    %c0_15 = arith.constant 0 : index
    %29 = vector.load %arg6[%c0_13, %c0_14, %c0_15] : memref<1x8x32xbf16, #tpu.memory_space<vmem>>, vector<1x8x32xbf16>
    %30 = vector.shape_cast %29 : vector<1x8x32xbf16> to vector<8x32xbf16>
    %31 = vector.shape_cast %28 : vector<8x32xbf16> to vector<1x8x32xbf16>
    tpu.vector_store %arg6[%c0_13, %c0_14, %c0_15], %31 {strides = array<i32>} : memref<1x8x32xbf16, #tpu.memory_space<vmem>>, vector<1x8x32xbf16>,
    %32 = vector.extract_strided_slice %26 {offsets = [0, 32], sizes = [8, 32], strides = [1, 1]} : vector<8x96xf32> to vector<8x32xf32>
    %33 = arith.truncf %32 : vector<8x32xf32> to vector<8x32xbf16>
    %c0_16 = arith.constant 0 : index
    %c0_17 = arith.constant 0 : index
    %c0_18 = arith.constant 0 : index
    %34 = vector.load %arg7[%c0_16, %c0_17, %c0_18] : memref<1x8x32xbf16, #tpu.memory_space<vmem>>, vector<1x8x32xbf16>
    %35 = vector.shape_cast %34 : vector<1x8x32xbf16> to vector<8x32xbf16>
    %36 = vector.shape_cast %33 : vector<8x32xbf16> to vector<1x8x32xbf16>
    tpu.vector_store %arg7[%c0_16, %c0_17, %c0_18], %36 {strides = array<i32>} : memref<1x8x32xbf16, #tpu.memory_space<vmem>>, vector<1x8x32xbf16>,
    %37 = vector.extract_strided_slice %26 {offsets = [0, 64], sizes = [8, 32], strides = [1, 1]} : vector<8x96xf32> to vector<8x32xf32>
    %38 = arith.truncf %37 : vector<8x32xf32> to vector<8x32xbf16>
    %c0_19 = arith.constant 0 : index
    %c0_20 = arith.constant 0 : index
    %c0_21 = arith.constant 0 : index
    %39 = vector.load %arg8[%c0_19, %c0_20, %c0_21] : memref<1x8x32xbf16, #tpu.memory_space<vmem>>, vector<1x8x32xbf16>
    %40 = vector.shape_cast %39 : vector<1x8x32xbf16> to vector<8x32xbf16>
    %41 = vector.shape_cast %38 : vector<8x32xbf16> to vector<1x8x32xbf16>
    tpu.vector_store %arg8[%c0_19, %c0_20, %c0_21], %41 {strides = array<i32>} : memref<1x8x32xbf16, #tpu.memory_space<vmem>>, vector<1x8x32xbf16>,
    return
  }
  func.func @transform_0(%arg0: i32, %arg1: i32) -> (i32, i32, i32) {
    %c0_i32 = arith.constant 0 : i32
    %c0_i32_0 = arith.constant 0 : i32
    return %arg0, %arg1, %c0_i32 : i32, i32, i32
  }
  func.func @transform_1(%arg0: i32, %arg1: i32) -> (i32, i32) {
    %c0_i32 = arith.constant 0 : i32
    %c0_i32_0 = arith.constant 0 : i32
    %c0_i32_1 = arith.constant 0 : i32
    return %c0_i32, %c0_i32_0 : i32, i32
  }
  func.func @transform_2(%arg0: i32, %arg1: i32) -> (i32, i32) {
    %c0_i32 = arith.constant 0 : i32
    %c0_i32_0 = arith.constant 0 : i32
    %c0_i32_1 = arith.constant 0 : i32
    return %c0_i32, %c0_i32_0 : i32, i32
  }
  func.func @transform_3(%arg0: i32, %arg1: i32) -> (i32, i32) {
    %c0_i32 = arith.constant 0 : i32
    %c0_i32_0 = arith.constant 0 : i32
    %c0_i32_1 = arith.constant 0 : i32
    return %c0_i32, %c0_i32_0 : i32, i32
  }
  func.func @transform_4(%arg0: i32, %arg1: i32) -> (i32, i32, i32) {
    %c0_i32 = arith.constant 0 : i32
    %c0_i32_0 = arith.constant 0 : i32
    return %arg0, %arg1, %c0_i32 : i32, i32, i32
  }
  func.func @transform_5(%arg0: i32, %arg1: i32) -> (i32, i32, i32) {
    %c0_i32 = arith.constant 0 : i32
    %c0_i32_0 = arith.constant 0 : i32
    return %arg0, %arg1, %c0_i32 : i32, i32, i32
  }
  func.func @transform_6(%arg0: i32, %arg1: i32) -> (i32, i32, i32) {
    %c0_i32 = arith.constant 0 : i32
    %c0_i32_0 = arith.constant 0 : i32
    return %arg0, %arg1, %c0_i32 : i32, i32, i32
  }
}

module attributes {stable_mosaic.version = 11 : i64} {
  func.func @attn_mlp_kernel(%arg0: i32, %arg1: i32, %arg2: i32, %arg3: memref<1x8x32xf32, #tpu.memory_space<vmem>>, %arg4: memref<1x4x8x8xbf16, #tpu.memory_space<vmem>>, %arg5: memref<1x4x8x8xbf16, #tpu.memory_space<vmem>>, %arg6: memref<1x4x8x8xbf16, #tpu.memory_space<vmem>>, %arg7: memref<4x8x32xbf16, #tpu.memory_space<vmem>>, %arg8: memref<1x32xf32, #tpu.memory_space<vmem>>, %arg9: memref<1x32xf32, #tpu.memory_space<vmem>>, %arg10: memref<32x128xbf16, #tpu.memory_space<vmem>>, %arg11: memref<1x128xf32, #tpu.memory_space<vmem>>, %arg12: memref<128x32xbf16, #tpu.memory_space<vmem>>, %arg13: memref<1x32xf32, #tpu.memory_space<vmem>>, %arg14: memref<1x8x32xf32, #tpu.memory_space<vmem>>, %arg15: memref<4x8x1xf32, #tpu.memory_space<vmem>>, %arg16: memref<4x8x1xf32, #tpu.memory_space<vmem>>, %arg17: memref<4x8x8xf32, #tpu.memory_space<vmem>>) attributes {dimension_semantics = [#tpu.dimension_semantics<parallel>, #tpu.dimension_semantics<parallel>, #tpu.dimension_semantics<arbitrary>], iteration_bounds = array<i64: 2, 1, 1>, scalar_prefetch = 0 : i64, scratch_operands = 3 : i64, tpu.core_type = #tpu.core_type<tc>, window_params = [{transform_indices = @transform_0, window_bounds = array<i64: 1, 8, 32>}, {transform_indices = @transform_1, window_bounds = array<i64: 1, 4, 8, 8>}, {transform_indices = @transform_2, window_bounds = array<i64: 1, 4, 8, 8>}, {transform_indices = @transform_3, window_bounds = array<i64: 1, 4, 8, 8>}, {pipeline_mode = #tpu.pipeline_mode<synchronous>, transform_indices = @transform_4, window_bounds = array<i64: 4, 8, 32>}, {pipeline_mode = #tpu.pipeline_mode<synchronous>, transform_indices = @transform_5, window_bounds = array<i64: 1, 32>}, {pipeline_mode = #tpu.pipeline_mode<synchronous>, transform_indices = @transform_6, window_bounds = array<i64: 1, 32>}, {pipeline_mode = #tpu.pipeline_mode<synchronous>, transform_indices = @transform_7, window_bounds = array<i64: 32, 128>}, {pipeline_mode = #tpu.pipeline_mode<synchronous>, transform_indices = @transform_8, window_bounds = array<i64: 1, 128>}, {pipeline_mode = #tpu.pipeline_mode<synchronous>, transform_indices = @transform_9, window_bounds = array<i64: 128, 32>}, {pipeline_mode = #tpu.pipeline_mode<synchronous>, transform_indices = @transform_10, window_bounds = array<i64: 1, 32>}, {transform_indices = @transform_11, window_bounds = array<i64: 1, 8, 32>}]} {
    %c0_i32 = arith.constant 0 : i32
    %0 = arith.cmpi eq, %arg2, %c0_i32 : i32
    %1 = arith.extui %0 : i1 to i32
    %c0_i32_0 = arith.constant 0 : i32
    %2 = arith.cmpi ne, %1, %c0_i32_0 : i32
    scf.if %2 {
      %cst = arith.constant 0xFF800000 : f32
      %9 = vector.broadcast %cst : f32 to vector<4x8x1xf32>
      %c0 = arith.constant 0 : index
      %c0_3 = arith.constant 0 : index
      %c0_4 = arith.constant 0 : index
      %10 = vector.load %arg15[%c0, %c0_3, %c0_4] : memref<4x8x1xf32, #tpu.memory_space<vmem>>, vector<4x8x1xf32>
      tpu.vector_store %arg15[%c0, %c0_3, %c0_4], %9 {strides = array<i32>} : memref<4x8x1xf32, #tpu.memory_space<vmem>>, vector<4x8x1xf32>,
      %cst_5 = arith.constant 0.000000e+00 : f32
      %11 = vector.broadcast %cst_5 : f32 to vector<4x8x1xf32>
      %c0_6 = arith.constant 0 : index
      %c0_7 = arith.constant 0 : index
      %c0_8 = arith.constant 0 : index
      %12 = vector.load %arg16[%c0_6, %c0_7, %c0_8] : memref<4x8x1xf32, #tpu.memory_space<vmem>>, vector<4x8x1xf32>
      tpu.vector_store %arg16[%c0_6, %c0_7, %c0_8], %11 {strides = array<i32>} : memref<4x8x1xf32, #tpu.memory_space<vmem>>, vector<4x8x1xf32>,
      %cst_9 = arith.constant 0.000000e+00 : f32
      %13 = vector.broadcast %cst_9 : f32 to vector<4x8x8xf32>
      %c0_10 = arith.constant 0 : index
      %c0_11 = arith.constant 0 : index
      %c0_12 = arith.constant 0 : index
      %14 = vector.load %arg17[%c0_10, %c0_11, %c0_12] : memref<4x8x8xf32, #tpu.memory_space<vmem>>, vector<4x8x8xf32>
      tpu.vector_store %arg17[%c0_10, %c0_11, %c0_12], %13 {strides = array<i32>} : memref<4x8x8xf32, #tpu.memory_space<vmem>>, vector<4x8x8xf32>,
    } else {
    }
    %3 = arith.cmpi sle, %arg2, %arg1 : i32
    %4 = arith.extui %3 : i1 to i32
    %c0_i32_1 = arith.constant 0 : i32
    %5 = arith.cmpi ne, %4, %c0_i32_1 : i32
    scf.if %5 {
      %c0 = arith.constant 0 : index
      %c0_3 = arith.constant 0 : index
      %c0_4 = arith.constant 0 : index
      %c0_5 = arith.constant 0 : index
      %9 = vector.load %arg4[%c0, %c0_3, %c0_4, %c0_5] : memref<1x4x8x8xbf16, #tpu.memory_space<vmem>>, vector<1x4x8x8xbf16>
      %10 = vector.shape_cast %9 : vector<1x4x8x8xbf16> to vector<4x8x8xbf16>
      %c0_6 = arith.constant 0 : index
      %c0_7 = arith.constant 0 : index
      %c0_8 = arith.constant 0 : index
      %c0_9 = arith.constant 0 : index
      %11 = vector.load %arg5[%c0_6, %c0_7, %c0_8, %c0_9] : memref<1x4x8x8xbf16, #tpu.memory_space<vmem>>, vector<1x4x8x8xbf16>
      %12 = vector.shape_cast %11 : vector<1x4x8x8xbf16> to vector<4x8x8xbf16>
      %c0_10 = arith.constant 0 : index
      %c0_11 = arith.constant 0 : index
      %c0_12 = arith.constant 0 : index
      %c0_13 = arith.constant 0 : index
      %13 = vector.load %arg6[%c0_10, %c0_11, %c0_12, %c0_13] : memref<1x4x8x8xbf16, #tpu.memory_space<vmem>>, vector<1x4x8x8xbf16>
      %14 = vector.shape_cast %13 : vector<1x4x8x8xbf16> to vector<4x8x8xbf16>
      "tpu.trace_start"() <{level = 10 : i32, message = "hqd,hkd->hqk"}> : () -> ()
      %cst = arith.constant dense<0.000000e+00> : vector<4x8x8xf32>
      %15 = tpu.matmul %10, %12, %cst {dimension_numbers = #tpu.dot_dimension_numbers<[2], [2], [1], [1], [0, 0, 0, 1, 1, 1], [0], [0]>} : vector<4x8x8xbf16>, vector<4x8x8xbf16>, vector<4x8x8xf32> -> vector<4x8x8xf32>
      "tpu.trace_stop"() : () -> ()
      %cst_14 = arith.constant 0.353553385 : f32
      %16 = vector.broadcast %cst_14 : f32 to vector<4x8x8xf32>
      %17 = arith.mulf %15, %16 : vector<4x8x8xf32>
      %c8_i32 = arith.constant 8 : i32
      %18 = arith.muli %arg1, %c8_i32 : i32
      %19 = tpu.iota {dimensions = array<i32: 0>} : vector<8x8xi32>
      %20 = vector.broadcast %18 : i32 to vector<8x8xi32>
      %21 = arith.addi %20, %19 : vector<8x8xi32>
      %c8_i32_15 = arith.constant 8 : i32
      %22 = arith.muli %arg2, %c8_i32_15 : i32
      %23 = tpu.iota {dimensions = array<i32: 1>} : vector<8x8xi32>
      %24 = vector.broadcast %22 : i32 to vector<8x8xi32>
      %25 = arith.addi %24, %23 : vector<8x8xi32>
      %26 = arith.cmpi sge, %21, %25 : vector<8x8xi32>
      %27 = vector.shape_cast %26 : vector<8x8xi1> to vector<1x8x8xi1>
      %cst_16 = arith.constant -1.000000e+30 : f32
      %28 = vector.shape_cast %27 : vector<1x8x8xi1> to vector<1x8x8xi1>
      %29 = vector.broadcast %28 : vector<1x8x8xi1> to vector<4x8x8xi1>
      %30 = vector.broadcast %cst_16 : f32 to vector<4x8x8xf32>
      %31 = arith.select %29, %17, %30 : vector<4x8x8xi1>, vector<4x8x8xf32>
      %c0_17 = arith.constant 0 : index
      %c0_18 = arith.constant 0 : index
      %c0_19 = arith.constant 0 : index
      %32 = vector.load %arg15[%c0_17, %c0_18, %c0_19] : memref<4x8x1xf32, #tpu.memory_space<vmem>>, vector<4x8x1xf32>
      %cst_20 = arith.constant dense<0xFF800000> : vector<4x8xf32>
      %33 = vector.multi_reduction <maximumf>, %31, %cst_20 [2] : vector<4x8x8xf32> to vector<4x8xf32>
      %34 = vector.shape_cast %33 : vector<4x8xf32> to vector<4x8x1xf32>
      %35 = arith.maximumf %32, %34 : vector<4x8x1xf32>
      %36 = arith.subf %32, %35 : vector<4x8x1xf32>
      %37 = math.exp %36 : vector<4x8x1xf32>
      %38 = vector.broadcast %35 : vector<4x8x1xf32> to vector<4x8x8xf32>
      %39 = arith.subf %31, %38 : vector<4x8x8xf32>
      %40 = math.exp %39 : vector<4x8x8xf32>
      %c0_21 = arith.constant 0 : index
      %c0_22 = arith.constant 0 : index
      %c0_23 = arith.constant 0 : index
      %41 = vector.load %arg16[%c0_21, %c0_22, %c0_23] : memref<4x8x1xf32, #tpu.memory_space<vmem>>, vector<4x8x1xf32>
      %42 = arith.mulf %37, %41 : vector<4x8x1xf32>
      %cst_24 = arith.constant dense<0.000000e+00> : vector<4x8xf32>
      %43 = vector.multi_reduction <add>, %40, %cst_24 [2] : vector<4x8x8xf32> to vector<4x8xf32>
      %44 = vector.shape_cast %43 : vector<4x8xf32> to vector<4x8x1xf32>
      %45 = arith.addf %42, %44 : vector<4x8x1xf32>
      %c0_25 = arith.constant 0 : index
      %c0_26 = arith.constant 0 : index
      %c0_27 = arith.constant 0 : index
      %46 = vector.load %arg16[%c0_25, %c0_26, %c0_27] : memref<4x8x1xf32, #tpu.memory_space<vmem>>, vector<4x8x1xf32>
      tpu.vector_store %arg16[%c0_25, %c0_26, %c0_27], %45 {strides = array<i32>} : memref<4x8x1xf32, #tpu.memory_space<vmem>>, vector<4x8x1xf32>,
      %c0_28 = arith.constant 0 : index
      %c0_29 = arith.constant 0 : index
      %c0_30 = arith.constant 0 : index
      %47 = vector.load %arg17[%c0_28, %c0_29, %c0_30] : memref<4x8x8xf32, #tpu.memory_space<vmem>>, vector<4x8x8xf32>
      %48 = vector.broadcast %37 : vector<4x8x1xf32> to vector<4x8x8xf32>
      %49 = arith.mulf %48, %47 : vector<4x8x8xf32>
      %50 = arith.truncf %40 : vector<4x8x8xf32> to vector<4x8x8xbf16>
      "tpu.trace_start"() <{level = 10 : i32, message = "hqk,hkd->hqd"}> : () -> ()
      %cst_31 = arith.constant dense<0.000000e+00> : vector<4x8x8xf32>
      %51 = tpu.matmul %50, %14, %cst_31 {dimension_numbers = #tpu.dot_dimension_numbers<[2], [1], [1], [2], [0, 0, 0, 1, 1, 2], [0], [0]>} : vector<4x8x8xbf16>, vector<4x8x8xbf16>, vector<4x8x8xf32> -> vector<4x8x8xf32>
      "tpu.trace_stop"() : () -> ()
      %52 = arith.addf %49, %51 : vector<4x8x8xf32>
      %c0_32 = arith.constant 0 : index
      %c0_33 = arith.constant 0 : index
      %c0_34 = arith.constant 0 : index
      %53 = vector.load %arg17[%c0_32, %c0_33, %c0_34] : memref<4x8x8xf32, #tpu.memory_space<vmem>>, vector<4x8x8xf32>
      tpu.vector_store %arg17[%c0_32, %c0_33, %c0_34], %52 {strides = array<i32>} : memref<4x8x8xf32, #tpu.memory_space<vmem>>, vector<4x8x8xf32>,
      %c0_35 = arith.constant 0 : index
      %c0_36 = arith.constant 0 : index
      %c0_37 = arith.constant 0 : index
      %54 = vector.load %arg15[%c0_35, %c0_36, %c0_37] : memref<4x8x1xf32, #tpu.memory_space<vmem>>, vector<4x8x1xf32>
      tpu.vector_store %arg15[%c0_35, %c0_36, %c0_37], %35 {strides = array<i32>} : memref<4x8x1xf32, #tpu.memory_space<vmem>>, vector<4x8x1xf32>,
    } else {
    }
    %6 = arith.cmpi eq, %arg2, %arg1 : i32
    %7 = arith.extui %6 : i1 to i32
    %c0_i32_2 = arith.constant 0 : i32
    %8 = arith.cmpi ne, %7, %c0_i32_2 : i32
    scf.if %8 {
      %c0 = arith.constant 0 : index
      %c0_3 = arith.constant 0 : index
      %c0_4 = arith.constant 0 : index
      %9 = vector.load %arg3[%c0, %c0_3, %c0_4] : memref<1x8x32xf32, #tpu.memory_space<vmem>>, vector<1x8x32xf32>
      %10 = vector.shape_cast %9 : vector<1x8x32xf32> to vector<8x32xf32>
      %c0_5 = arith.constant 0 : index
      %c0_6 = arith.constant 0 : index
      %c0_7 = arith.constant 0 : index
      %11 = vector.load %arg17[%c0_5, %c0_6, %c0_7] : memref<4x8x8xf32, #tpu.memory_space<vmem>>, vector<4x8x8xf32>
      %c0_8 = arith.constant 0 : index
      %c0_9 = arith.constant 0 : index
      %c0_10 = arith.constant 0 : index
      %12 = vector.load %arg16[%c0_8, %c0_9, %c0_10] : memref<4x8x1xf32, #tpu.memory_space<vmem>>, vector<4x8x1xf32>
      %13 = tpu.reciprocal %12 {approx = true} : vector<4x8x1xf32> -> vector<4x8x1xf32>
      %14 = vector.broadcast %13 : vector<4x8x1xf32> to vector<4x8x8xf32>
      %15 = arith.mulf %11, %14 : vector<4x8x8xf32>
      %16 = arith.truncf %15 : vector<4x8x8xf32> to vector<4x8x8xbf16>
      %cst = arith.constant 0.000000e+00 : f32
      %17 = vector.broadcast %cst : f32 to vector<8x32xf32>
      %18 = vector.extract_strided_slice %16 {offsets = [0, 0, 0], sizes = [1, 8, 8], strides = [1, 1, 1]} : vector<4x8x8xbf16> to vector<1x8x8xbf16>
      %19 = vector.shape_cast %18 : vector<1x8x8xbf16> to vector<8x8xbf16>
      %c0_11 = arith.constant 0 : index
      %c0_12 = arith.constant 0 : index
      %c0_13 = arith.constant 0 : index
      %20 = vector.load %arg7[%c0_11, %c0_12, %c0_13] : memref<4x8x32xbf16, #tpu.memory_space<vmem>>, vector<1x8x32xbf16>
      %21 = vector.shape_cast %20 : vector<1x8x32xbf16> to vector<8x32xbf16>
      %cst_14 = arith.constant dense<0.000000e+00> : vector<8x32xf32>
      %22 = tpu.matmul %19, %21, %cst_14 {dimension_numbers = #tpu.dot_dimension_numbers<[1], [0], [0], [1], [0, 0, 1, 1], [], []>} : vector<8x8xbf16>, vector<8x32xbf16>, vector<8x32xf32> -> vector<8x32xf32>
      %23 = arith.addf %17, %22 : vector<8x32xf32>
      %24 = vector.extract_strided_slice %16 {offsets = [1, 0, 0], sizes = [1, 8, 8], strides = [1, 1, 1]} : vector<4x8x8xbf16> to vector<1x8x8xbf16>
      %25 = vector.shape_cast %24 : vector<1x8x8xbf16> to vector<8x8xbf16>
      %c1 = arith.constant 1 : index
      %c0_15 = arith.constant 0 : index
      %c0_16 = arith.constant 0 : index
      %26 = vector.load %arg7[%c1, %c0_15, %c0_16] : memref<4x8x32xbf16, #tpu.memory_space<vmem>>, vector<1x8x32xbf16>
      %27 = vector.shape_cast %26 : vector<1x8x32xbf16> to vector<8x32xbf16>
      %cst_17 = arith.constant dense<0.000000e+00> : vector<8x32xf32>
      %28 = tpu.matmul %25, %27, %cst_17 {dimension_numbers = #tpu.dot_dimension_numbers<[1], [0], [0], [1], [0, 0, 1, 1], [], []>} : vector<8x8xbf16>, vector<8x32xbf16>, vector<8x32xf32> -> vector<8x32xf32>
      %29 = arith.addf %23, %28 : vector<8x32xf32>
      %30 = vector.extract_strided_slice %16 {offsets = [2, 0, 0], sizes = [1, 8, 8], strides = [1, 1, 1]} : vector<4x8x8xbf16> to vector<1x8x8xbf16>
      %31 = vector.shape_cast %30 : vector<1x8x8xbf16> to vector<8x8xbf16>
      %c2 = arith.constant 2 : index
      %c0_18 = arith.constant 0 : index
      %c0_19 = arith.constant 0 : index
      %32 = vector.load %arg7[%c2, %c0_18, %c0_19] : memref<4x8x32xbf16, #tpu.memory_space<vmem>>, vector<1x8x32xbf16>
      %33 = vector.shape_cast %32 : vector<1x8x32xbf16> to vector<8x32xbf16>
      %cst_20 = arith.constant dense<0.000000e+00> : vector<8x32xf32>
      %34 = tpu.matmul %31, %33, %cst_20 {dimension_numbers = #tpu.dot_dimension_numbers<[1], [0], [0], [1], [0, 0, 1, 1], [], []>} : vector<8x8xbf16>, vector<8x32xbf16>, vector<8x32xf32> -> vector<8x32xf32>
      %35 = arith.addf %29, %34 : vector<8x32xf32>
      %36 = vector.extract_strided_slice %16 {offsets = [3, 0, 0], sizes = [1, 8, 8], strides = [1, 1, 1]} : vector<4x8x8xbf16> to vector<1x8x8xbf16>
      %37 = vector.shape_cast %36 : vector<1x8x8xbf16> to vector<8x8xbf16>
      %c3 = arith.constant 3 : index
      %c0_21 = arith.constant 0 : index
      %c0_22 = arith.constant 0 : index
      %38 = vector.load %arg7[%c3, %c0_21, %c0_22] : memref<4x8x32xbf16, #tpu.memory_space<vmem>>, vector<1x8x32xbf16>
      %39 = vector.shape_cast %38 : vector<1x8x32xbf16> to vector<8x32xbf16>
      %cst_23 = arith.constant dense<0.000000e+00> : vector<8x32xf32>
      %40 = tpu.matmul %37, %39, %cst_23 {dimension_numbers = #tpu.dot_dimension_numbers<[1], [0], [0], [1], [0, 0, 1, 1], [], []>} : vector<8x8xbf16>, vector<8x32xbf16>, vector<8x32xf32> -> vector<8x32xf32>
      %41 = arith.addf %35, %40 : vector<8x32xf32>
      %42 = arith.addf %10, %41 : vector<8x32xf32>
      %c0_24 = arith.constant 0 : index
      %c0_25 = arith.constant 0 : index
      %43 = vector.load %arg8[%c0_24, %c0_25] : memref<1x32xf32, #tpu.memory_space<vmem>>, vector<1x32xf32>
      %c0_26 = arith.constant 0 : index
      %c0_27 = arith.constant 0 : index
      %44 = vector.load %arg9[%c0_26, %c0_27] : memref<1x32xf32, #tpu.memory_space<vmem>>, vector<1x32xf32>
      %cst_28 = arith.constant dense<0.000000e+00> : vector<8xf32>
      %45 = vector.multi_reduction <add>, %42, %cst_28 [1] : vector<8x32xf32> to vector<8xf32>
      %46 = vector.shape_cast %45 : vector<8xf32> to vector<8x1xf32>
      %cst_29 = arith.constant 3.200000e+01 : f32
      %47 = vector.broadcast %cst_29 : f32 to vector<8x1xf32>
      %48 = arith.divf %46, %47 : vector<8x1xf32>
      %49 = vector.broadcast %48 : vector<8x1xf32> to vector<8x32xf32>
      %50 = arith.subf %42, %49 : vector<8x32xf32>
      %51 = arith.mulf %50, %50 : vector<8x32xf32>
      %cst_30 = arith.constant dense<0.000000e+00> : vector<8xf32>
      %52 = vector.multi_reduction <add>, %51, %cst_30 [1] : vector<8x32xf32> to vector<8xf32>
      %53 = vector.shape_cast %52 : vector<8xf32> to vector<8x1xf32>
      %cst_31 = arith.constant 0.0322580636 : f32
      %54 = vector.broadcast %cst_31 : f32 to vector<8x1xf32>
      %55 = arith.mulf %53, %54 : vector<8x1xf32>
      %cst_32 = arith.constant 9.99999974E-6 : f32
      %56 = vector.broadcast %cst_32 : f32 to vector<8x1xf32>
      %57 = arith.addf %55, %56 : vector<8x1xf32>
      %58 = math.rsqrt %57 : vector<8x1xf32>
      %59 = vector.broadcast %58 : vector<8x1xf32> to vector<8x32xf32>
      %60 = arith.mulf %50, %59 : vector<8x32xf32>
      %61 = vector.broadcast %43 : vector<1x32xf32> to vector<8x32xf32>
      %62 = arith.mulf %60, %61 : vector<8x32xf32>
      %63 = vector.broadcast %44 : vector<1x32xf32> to vector<8x32xf32>
      %64 = arith.addf %62, %63 : vector<8x32xf32>
      %65 = arith.truncf %64 : vector<8x32xf32> to vector<8x32xbf16>
      %c0_33 = arith.constant 0 : index
      %c0_34 = arith.constant 0 : index
      %66 = vector.load %arg10[%c0_33, %c0_34] : memref<32x128xbf16, #tpu.memory_space<vmem>>, vector<32x128xbf16>
      %cst_35 = arith.constant dense<0.000000e+00> : vector<8x128xf32>
      %67 = tpu.matmul %65, %66, %cst_35 {dimension_numbers = #tpu.dot_dimension_numbers<[1], [0], [0], [1], [0, 0, 1, 1], [], []>} : vector<8x32xbf16>, vector<32x128xbf16>, vector<8x128xf32> -> vector<8x128xf32>
      %c0_36 = arith.constant 0 : index
      %c0_37 = arith.constant 0 : index
      %68 = vector.load %arg11[%c0_36, %c0_37] : memref<1x128xf32, #tpu.memory_space<vmem>>, vector<1x128xf32>
      %69 = vector.broadcast %68 : vector<1x128xf32> to vector<8x128xf32>
      %70 = arith.addf %67, %69 : vector<8x128xf32>
      %cst_38 = arith.constant 1.702000e+00 : f32
      %71 = vector.broadcast %cst_38 : f32 to vector<8x128xf32>
      %72 = arith.mulf %71, %70 : vector<8x128xf32>
      %73 = arith.negf %72 : vector<8x128xf32>
      %74 = math.exp %73 : vector<8x128xf32>
      %cst_39 = arith.constant 1.000000e+00 : f32
      %75 = vector.broadcast %cst_39 : f32 to vector<8x128xf32>
      %76 = arith.addf %75, %74 : vector<8x128xf32>
      %77 = arith.divf %75, %76 : vector<8x128xf32>
      %78 = arith.mulf %70, %77 : vector<8x128xf32>
      %79 = arith.truncf %78 : vector<8x128xf32> to vector<8x128xbf16>
      %c0_40 = arith.constant 0 : index
      %c0_41 = arith.constant 0 : index
      %80 = vector.load %arg12[%c0_40, %c0_41] : memref<128x32xbf16, #tpu.memory_space<vmem>>, vector<128x32xbf16>
      %cst_42 = arith.constant dense<0.000000e+00> : vector<8x32xf32>
      %81 = tpu.matmul %79, %80, %cst_42 {dimension_numbers = #tpu.dot_dimension_numbers<[1], [0], [0], [1], [0, 0, 1, 1], [], []>} : vector<8x128xbf16>, vector<128x32xbf16>, vector<8x32xf32> -> vector<8x32xf32>
      %c0_43 = arith.constant 0 : index
      %c0_44 = arith.constant 0 : index
      %82 = vector.load %arg13[%c0_43, %c0_44] : memref<1x32xf32, #tpu.memory_space<vmem>>, vector<1x32xf32>
      %83 = vector.broadcast %82 : vector<1x32xf32> to vector<8x32xf32>
      %84 = arith.addf %81, %83 : vector<8x32xf32>
      %85 = arith.addf %42, %84 : vector<8x32xf32>
      %c0_45 = arith.constant 0 : index
      %c0_46 = arith.constant 0 : index
      %c0_47 = arith.constant 0 : index
      %86 = vector.load %arg14[%c0_45, %c0_46, %c0_47] : memref<1x8x32xf32, #tpu.memory_space<vmem>>, vector<1x8x32xf32>
      %87 = vector.shape_cast %86 : vector<1x8x32xf32> to vector<8x32xf32>
      %88 = vector.shape_cast %85 : vector<8x32xf32> to vector<1x8x32xf32>
      tpu.vector_store %arg14[%c0_45, %c0_46, %c0_47], %88 {strides = array<i32>} : memref<1x8x32xf32, #tpu.memory_space<vmem>>, vector<1x8x32xf32>,
    } else {
    }
    return
  }
  func.func @transform_0(%arg0: i32, %arg1: i32, %arg2: i32) -> (i32, i32, i32) {
    %c0_i32 = arith.constant 0 : i32
    %c0_i32_0 = arith.constant 0 : i32
    return %arg0, %arg1, %c0_i32 : i32, i32, i32
  }
  func.func @transform_1(%arg0: i32, %arg1: i32, %arg2: i32) -> (i32, i32, i32, i32) {
    %c0_i32 = arith.constant 0 : i32
    %c0_i32_0 = arith.constant 0 : i32
    %c0_i32_1 = arith.constant 0 : i32
    return %arg0, %c0_i32, %arg1, %c0_i32_0 : i32, i32, i32, i32
  }
  func.func @transform_2(%arg0: i32, %arg1: i32, %arg2: i32) -> (i32, i32, i32, i32) {
    %0 = arith.minsi %arg2, %arg1 : i32
    %c0_i32 = arith.constant 0 : i32
    %c0_i32_0 = arith.constant 0 : i32
    %c0_i32_1 = arith.constant 0 : i32
    return %arg0, %c0_i32, %0, %c0_i32_0 : i32, i32, i32, i32
  }
  func.func @transform_3(%arg0: i32, %arg1: i32, %arg2: i32) -> (i32, i32, i32, i32) {
    %0 = arith.minsi %arg2, %arg1 : i32
    %c0_i32 = arith.constant 0 : i32
    %c0_i32_0 = arith.constant 0 : i32
    %c0_i32_1 = arith.constant 0 : i32
    return %arg0, %c0_i32, %0, %c0_i32_0 : i32, i32, i32, i32
  }
  func.func @transform_4(%arg0: i32, %arg1: i32, %arg2: i32) -> (i32, i32, i32) {
    %c0_i32 = arith.constant 0 : i32
    %c0_i32_0 = arith.constant 0 : i32
    %c0_i32_1 = arith.constant 0 : i32
    %c0_i32_2 = arith.constant 0 : i32
    return %c0_i32, %c0_i32_0, %c0_i32_1 : i32, i32, i32
  }
  func.func @transform_5(%arg0: i32, %arg1: i32, %arg2: i32) -> (i32, i32) {
    %c0_i32 = arith.constant 0 : i32
    %c0_i32_0 = arith.constant 0 : i32
    %c0_i32_1 = arith.constant 0 : i32
    return %c0_i32, %c0_i32_0 : i32, i32
  }
  func.func @transform_6(%arg0: i32, %arg1: i32, %arg2: i32) -> (i32, i32) {
    %c0_i32 = arith.constant 0 : i32
    %c0_i32_0 = arith.constant 0 : i32
    %c0_i32_1 = arith.constant 0 : i32
    return %c0_i32, %c0_i32_0 : i32, i32
  }
  func.func @transform_7(%arg0: i32, %arg1: i32, %arg2: i32) -> (i32, i32) {
    %c0_i32 = arith.constant 0 : i32
    %c0_i32_0 = arith.constant 0 : i32
    %c0_i32_1 = arith.constant 0 : i32
    return %c0_i32, %c0_i32_0 : i32, i32
  }
  func.func @transform_8(%arg0: i32, %arg1: i32, %arg2: i32) -> (i32, i32) {
    %c0_i32 = arith.constant 0 : i32
    %c0_i32_0 = arith.constant 0 : i32
    %c0_i32_1 = arith.constant 0 : i32
    return %c0_i32, %c0_i32_0 : i32, i32
  }
  func.func @transform_9(%arg0: i32, %arg1: i32, %arg2: i32) -> (i32, i32) {
    %c0_i32 = arith.constant 0 : i32
    %c0_i32_0 = arith.constant 0 : i32
    %c0_i32_1 = arith.constant 0 : i32
    return %c0_i32, %c0_i32_0 : i32, i32
  }
  func.func @transform_10(%arg0: i32, %arg1: i32, %arg2: i32) -> (i32, i32) {
    %c0_i32 = arith.constant 0 : i32
    %c0_i32_0 = arith.constant 0 : i32
    %c0_i32_1 = arith.constant 0 : i32
    return %c0_i32, %c0_i32_0 : i32, i32
  }
  func.func @transform_11(%arg0: i32, %arg1: i32, %arg2: i32) -> (i32, i32, i32) {
    %c0_i32 = arith.constant 0 : i32
    %c0_i32_0 = arith.constant 0 : i32
    return %arg0, %arg1, %c0_i32 : i32, i32, i32
  }
}

</mosaic_0001>

<llo_original>
// kernel: _nanogpt_block_impl.2
$region0: #{_nanogpt_block_impl.2}
  #allocation0 [shape = 'u32[]', space=smem, size = 0x4, offset = 0x4, fixed_abs, tag = 'smem constant byte address 0x4 - core index']
  #allocation1 [shape = 'u32[144,128]{1,0:T(1,128)}', space=vmem, size = 0x12000, scoped, tag = 'internal scratch']
  %s0 = inlined_call_operand.vmem [shape: f32[2,8,32], index: 0, kind: input, shape index: {}]
  %s1 = inlined_call_operand.vmem [shape: f32[1,32], index: 1, kind: input, shape index: {}]
  %s2 = inlined_call_operand.vmem [shape: f32[1,32], index: 2, kind: input, shape index: {}]
  %s3 = inlined_call_operand.vmem [shape: bf16[32,96], index: 3, kind: input, shape index: {}]
  %s4 = inlined_call_operand.vmem [shape: bf16[2,8,32], index: 4, kind: output, shape index: {0}]
  %s5 = inlined_call_operand.vmem [shape: bf16[2,8,32], index: 5, kind: output, shape index: {1}]
  %s6 = inlined_call_operand.vmem [shape: bf16[2,8,32], index: 6, kind: output, shape index: {2}]
  %7 = xla_tuple %s4, %s5, %s6
  %s8 = sld [smem:[#allocation0]]
  $region65: #{_nanogpt_block_impl.2} parent=0
    _
  %s10 = ssub.s32 1, %s8
  %s11 = scalar_select 0, %s10, %s8
  loop: start=0, step=1, limit=4
  $region2: #{_nanogpt_block_impl.2} parent=0 // loop_pre_header
    _
  $region3: #{_nanogpt_block_impl.2} parent=0 // loop_header
    %s13 = sphi 0, %s17
    %p14 = scmp.ge.s32.totalorder %s13, 4
    %s20 = sphi 0, %s32
    %s21 = sphi 0, %s28
    %s22 = sphi 0, %s20
    %s23 = sphi 0, %s21
    %s24 = sphi 0, %s22
    %s25 = sphi 0, %s23
    %s37 = sphi 0, %s39
    %s40 = sphi 0, %s37
    %s41 = sphi 0, %s40
    %s57 = sphi 0, %s41
    %s61 = sphi 0, %s61
    %s63 = sphi 0, %s61
    %s64 = sphi 0, %s63
    %s78 = sphi 0, %s64
    %s82 = sphi 0, %s82
    %s84 = sphi 0, %s82
    %s85 = sphi 0, %s84
    %s99 = sphi 0, %s85
    %s103 = sphi 0, %s103
    %s105 = sphi 0, %s103
    %s106 = sphi 0, %s105
    %s120 = sphi 0, %s106
    %s128 = sphi 0, %s130
    %s131 = sphi 0, %s128
    %s132 = sphi 0, %s131
    %s148 = sphi 0, %s132
    %s156 = sphi 0, %s158
    %s159 = sphi 0, %s156
    %s160 = sphi 0, %s159
    %s176 = sphi 0, %s160
    %s184 = sphi 0, %s186
    %s187 = sphi 0, %s184
    %s188 = sphi 0, %s187
    %s204 = sphi 0, %s188
  $region4: #{_nanogpt_block_impl.2} parent=0 // loop_header_branch
    %16 = sbr.rel (%p14) target = $region8
  $region5: #{_nanogpt_block_impl.2} parent=0 // loop_body
    %s18 = ssub.s32 %s13, 1
    %s19 = ssub.s32 %s13, 2
    %s26 = sadd.s32 1, %s21
    %p27 = scmp.ge.s32.totalorder %s26, 1
    %s28 = scalar_select %p27, 0, %s26
    %s29 = sadd.s32 1, %s20
    %s30 = scalar_select %p27, %s29, %s20
    %p31 = scmp.ge.s32.totalorder %s30, 2
    %s32 = scalar_select %p31, 0, %s30
    %s33 = ssub.s32 %s20, %s32
    %s34 = ssub.s32 %s21, %s28
    %s35 = sor.u32 %s33, %s34
    %p36 = scmp.eq.s32.totalorder %s35, 0
    %s38 = sadd.s32 %s37, 1
    %s39 = scalar_select %p36, %s37, %s38
    %p42 = pneg %p36
    %p43 = scmp.eq.s32.totalorder %s13, 1
    %p44 = por %p42, %p43
    %p45 = scmp.ne.s32.totalorder %s37, %s40
    %p46 = scmp.eq.s32.totalorder %s13, 0
    %p47 = por %p45, %p46
    %p48 = scmp.ne.s32.totalorder %s37, %s40
    %p49 = scmp.eq.s32.totalorder %s18, 1
    %p50 = por %p48, %p49
    %p51 = scmp.ne.s32.totalorder %s40, %s41
    %p52 = scmp.eq.s32.totalorder %s18, 0
    %p53 = por %p51, %p52
    %p54 = scmp.ne.s32.totalorder %s40, %s41
    %p55 = scmp.eq.s32.totalorder %s19, 1
    %p56 = por %p54, %p55
    %p58 = scmp.ne.s32.totalorder %s41, %s57
    %p59 = scmp.eq.s32.totalorder %s19, 0
    %p60 = por %p58, %p59
    %s62 = sadd.s32 %s61, 1
    %p65 = scmp.eq.s32.totalorder %s13, 1
    %p66 = scmp.ne.s32.totalorder %s61, %s63
    %p67 = scmp.eq.s32.totalorder %s13, 0
    %p68 = por %p66, %p67
    %p69 = scmp.ne.s32.totalorder %s61, %s63
    %p70 = scmp.eq.s32.totalorder %s18, 1
    %p71 = por %p69, %p70
    %p72 = scmp.ne.s32.totalorder %s63, %s64
    %p73 = scmp.eq.s32.totalorder %s18, 0
    %p74 = por %p72, %p73
    %p75 = scmp.ne.s32.totalorder %s63, %s64
    %p76 = scmp.eq.s32.totalorder %s19, 1
    %p77 = por %p75, %p76
    %p79 = scmp.ne.s32.totalorder %s64, %s78
    %p80 = scmp.eq.s32.totalorder %s19, 0
    %p81 = por %p79, %p80
    %s83 = sadd.s32 %s82, 1
    %p86 = scmp.eq.s32.totalorder %s13, 1
    %p87 = scmp.ne.s32.totalorder %s82, %s84
    %p88 = scmp.eq.s32.totalorder %s13, 0
    %p89 = por %p87, %p88
    %p90 = scmp.ne.s32.totalorder %s82, %s84
    %p91 = scmp.eq.s32.totalorder %s18, 1
    %p92 = por %p90, %p91
    %p93 = scmp.ne.s32.totalorder %s84, %s85
    %p94 = scmp.eq.s32.totalorder %s18, 0
    %p95 = por %p93, %p94
    %p96 = scmp.ne.s32.totalorder %s84, %s85
    %p97 = scmp.eq.s32.totalorder %s19, 1
    %p98 = por %p96, %p97
    %p100 = scmp.ne.s32.totalorder %s85, %s99
    %p101 = scmp.eq.s32.totalorder %s19, 0
    %p102 = por %p100, %p101
    %s104 = sadd.s32 %s103, 1
    %p107 = scmp.eq.s32.totalorder %s13, 1
    %p108 = scmp.ne.s32.totalorder %s103, %s105
    %p109 = scmp.eq.s32.totalorder %s13, 0
    %p110 = por %p108, %p109
    %p111 = scmp.ne.s32.totalorder %s103, %s105
    %p112 = scmp.eq.s32.totalorder %s18, 1
    %p113 = por %p111, %p112
    %p114 = scmp.ne.s32.totalorder %s105, %s106
    %p115 = scmp.eq.s32.totalorder %s18, 0
    %p116 = por %p114, %p115
    %p117 = scmp.ne.s32.totalorder %s105, %s106
    %p118 = scmp.eq.s32.totalorder %s19, 1
    %p119 = por %p117, %p118
    %p121 = scmp.ne.s32.totalorder %s106, %s120
    %p122 = scmp.eq.s32.totalorder %s19, 0
    %p123 = por %p121, %p122
    %s124 = ssub.s32 %s20, %s32
    %s125 = ssub.s32 %s21, %s28
    %s126 = sor.u32 %s124, %s125
    %p127 = scmp.eq.s32.totalorder %s126, 0
    %s129 = sadd.s32 %s128, 1
    %s130 = scalar_select %p127, %s128, %s129
    %p133 = pneg %p127
    %p134 = scmp.eq.s32.totalorder %s13, 1
    %p135 = por %p133, %p134
    %p136 = scmp.ne.s32.totalorder %s128, %s131
    %p137 = scmp.eq.s32.totalorder %s13, 0
    %p138 = por %p136, %p137
    %p139 = scmp.ne.s32.totalorder %s128, %s131
    %p140 = scmp.eq.s32.totalorder %s18, 1
    %p141 = por %p139, %p140
    %p142 = scmp.ne.s32.totalorder %s131, %s132
    %p143 = scmp.eq.s32.totalorder %s18, 0
    %p144 = por %p142, %p143
    %p145 = scmp.ne.s32.totalorder %s131, %s132
    %p146 = scmp.eq.s32.totalorder %s19, 1
    %p147 = por %p145, %p146
    %p149 = scmp.ne.s32.totalorder %s132, %s148
    %p150 = scmp.eq.s32.totalorder %s19, 0
    %p151 = por %p149, %p150
    %s152 = ssub.s32 %s20, %s32
    %s153 = ssub.s32 %s21, %s28
    %s154 = sor.u32 %s152, %s153
    %p155 = scmp.eq.s32.totalorder %s154, 0
    %s157 = sadd.s32 %s156, 1
    %s158 = scalar_select %p155, %s156, %s157
    %p161 = pneg %p155
    %p162 = scmp.eq.s32.totalorder %s13, 1
    %p163 = por %p161, %p162
    %p164 = scmp.ne.s32.totalorder %s156, %s159
    %p165 = scmp.eq.s32.totalorder %s13, 0
    %p166 = por %p164, %p165
    %p167 = scmp.ne.s32.totalorder %s156, %s159
    %p168 = scmp.eq.s32.totalorder %s18, 1
    %p169 = por %p167, %p168
    %p170 = scmp.ne.s32.totalorder %s159, %s160
    %p171 = scmp.eq.s32.totalorder %s18, 0
    %p172 = por %p170, %p171
    %p173 = scmp.ne.s32.totalorder %s159, %s160
    %p174 = scmp.eq.s32.totalorder %s19, 1
    %p175 = por %p173, %p174
    %p177 = scmp.ne.s32.totalorder %s160, %s176
    %p178 = scmp.eq.s32.totalorder %s19, 0
    %p179 = por %p177, %p178
    %s180 = ssub.s32 %s20, %s32
    %s181 = ssub.s32 %s21, %s28
    %s182 = sor.u32 %s180, %s181
    %p183 = scmp.eq.s32.totalorder %s182, 0
    %s185 = sadd.s32 %s184, 1
    %s186 = scalar_select %p183, %s184, %s185
    %p189 = pneg %p183
    %p190 = scmp.eq.s32.totalorder %s13, 1
    %p191 = por %p189, %p190
    %p192 = scmp.ne.s32.totalorder %s184, %s187
    %p193 = scmp.eq.s32.totalorder %s13, 0
    %p194 = por %p192, %p193
    %p195 = scmp.ne.s32.totalorder %s184, %s187
    %p196 = scmp.eq.s32.totalorder %s18, 1
    %p197 = por %p195, %p196
    %p198 = scmp.ne.s32.totalorder %s187, %s188
    %p199 = scmp.eq.s32.totalorder %s18, 0
    %p200 = por %p198, %p199
    %p201 = scmp.ne.s32.totalorder %s187, %s188
    %p202 = scmp.eq.s32.totalorder %s19, 1
    %p203 = por %p201, %p202
    %p205 = scmp.ne.s32.totalorder %s188, %s204
    %p206 = scmp.eq.s32.totalorder %s19, 0
    %p207 = por %p205, %p206
    %p208 = scmp.le.s32.totalorder 1, %s13
    %p209 = scmp.lt.s32.totalorder %s13, 3
    %p210 = pnand %p208, %p209
    %p211 = pneg %p210
    // Predicated region
    $region9: #{_nanogpt_block_impl.2} parent=5 // pred_check
      _
    $region10: #{_nanogpt_block_impl.2} parent=5 // pred_check_branch
      %213 = sbr.rel (%p210) target = $region12
    $region11: #{_nanogpt_block_impl.2} parent=5 // pred_region
      %s214 = ssub.s32 %s13, 1
      // Predicated region
      $region13: #{_nanogpt_block_impl.2} parent=11 // pred_check
        %p215 = pneg %p74
      $region14: #{_nanogpt_block_impl.2} parent=11 // pred_check_branch
        %217 = sbr.rel (%p215) target = $region16
      $region15: #{_nanogpt_block_impl.2} parent=11 // pred_region
        _
      $region16: #{_nanogpt_block_impl.2} parent=11 // pred_fallthru
        _
      // Predicated region
      $region17: #{_nanogpt_block_impl.2} parent=11 // pred_check
        %p218 = pneg %p95
      $region18: #{_nanogpt_block_impl.2} parent=11 // pred_check_branch
        %220 = sbr.rel (%p218) target = $region20
      $region19: #{_nanogpt_block_impl.2} parent=11 // pred_region
        _
      $region20: #{_nanogpt_block_impl.2} parent=11 // pred_fallthru
        _
      // Predicated region
      $region21: #{_nanogpt_block_impl.2} parent=11 // pred_check
        %p221 = pneg %p116
      $region22: #{_nanogpt_block_impl.2} parent=11 // pred_check_branch
        %223 = sbr.rel (%p221) target = $region24
      $region23: #{_nanogpt_block_impl.2} parent=11 // pred_region
        _
      $region24: #{_nanogpt_block_impl.2} parent=11 // pred_fallthru
        _
    $region12: #{_nanogpt_block_impl.2} parent=5 // pred_fallthru
      _
    %p224 = scmp.lt.s32.totalorder %s13, 2
    // Predicated region
    $region25: #{_nanogpt_block_impl.2} parent=5 // pred_check
      %p225 = pneg %p224
    $region26: #{_nanogpt_block_impl.2} parent=5 // pred_check_branch
      %227 = sbr.rel (%p225) target = $region28
    $region27: #{_nanogpt_block_impl.2} parent=5 // pred_region
      // Predicated region
      $region29: #{_nanogpt_block_impl.2} parent=27 // pred_check
        %p228 = pneg %p47
      $region30: #{_nanogpt_block_impl.2} parent=27 // pred_check_branch
        %230 = sbr.rel (%p228) target = $region32
      $region31: #{_nanogpt_block_impl.2} parent=27 // pred_region
        %p231 = scmp.lt.s32.totalorder %s20, 1
        %s232 = scalar_select %p231, %s20, 1
        %p233 = scmp.lt.s32.totalorder %s21, 0
        %s234 = scalar_select %p233, %s21, 0
        %s235 = sadd.s32 %s234, %s232
        %s236 = smul.addr %s235, 8
        %s237 = scalar_lea.vmem %s0, %s236
      $region32: #{_nanogpt_block_impl.2} parent=27 // pred_fallthru
        _
    $region28: #{_nanogpt_block_impl.2} parent=5 // pred_fallthru
      _
    %p238 = scmp.le.s32.totalorder 1, %s13
    %p239 = scmp.lt.s32.totalorder %s13, 3
    %p240 = pnand %p238, %p239
    %p241 = pneg %p240
    // Predicated region
    $region33: #{_nanogpt_block_impl.2} parent=5 // pred_check
      _
    $region34: #{_nanogpt_block_impl.2} parent=5 // pred_check_branch
      %243 = sbr.rel (%p240) target = $region36
    $region35: #{_nanogpt_block_impl.2} parent=5 // pred_region
      %s244 = ssub.s32 %s13, 1
      %p245 = scmp.lt.s32.totalorder %s22, 1
      %s246 = scalar_select %p245, %s22, 1
      %p247 = scmp.lt.s32.totalorder %s23, 0
      %s248 = scalar_select %p247, %s23, 0
      %s249 = sadd.s32 %s248, %s246
      %s250 = smul.addr %s249, 8
      %s251 = scalar_lea.vmem %s0, %s250
      %p252 = pneg %p53
      %p253 = pneg %p50
      %p254 = pneg %p74
      %p255 = pneg %p71
      %p256 = pneg %p95
      %p257 = pneg %p92
      %p258 = pneg %p116
      %p259 = pneg %p113
      %p260 = pneg %p144
      %p261 = pneg %p141
      %p262 = scmp.lt.s32.totalorder %s22, 1
      %s263 = scalar_select %p262, %s22, 1
      %p264 = scmp.lt.s32.totalorder %s23, 0
      %s265 = scalar_select %p264, %s23, 0
      %s266 = sadd.s32 %s265, %s263
      %s267 = smul.addr %s266, 4
      %s268 = scalar_lea.vmem %s4, %s267
      %p269 = pneg %p172
      %p270 = pneg %p169
      %p271 = scmp.lt.s32.totalorder %s22, 1
      %s272 = scalar_select %p271, %s22, 1
      %p273 = scmp.lt.s32.totalorder %s23, 0
      %s274 = scalar_select %p273, %s23, 0
      %s275 = sadd.s32 %s274, %s272
      %s276 = smul.addr %s275, 4
      %s277 = scalar_lea.vmem %s5, %s276
      %p278 = pneg %p200
      %p279 = pneg %p197
      %p280 = scmp.lt.s32.totalorder %s22, 1
      %s281 = scalar_select %p280, %s22, 1
      %p282 = scmp.lt.s32.totalorder %s23, 0
      %s283 = scalar_select %p282, %s23, 0
      %s284 = sadd.s32 %s283, %s281
      %s285 = smul.addr %s284, 4
      %s286 = scalar_lea.vmem %s6, %s285
      %p287 = scmp.lt.s32.totalorder %s22, 1
      %s288 = scalar_select %p287, %s22, 1
      %p289 = scmp.lt.s32.totalorder %s23, 0
      %s290 = scalar_select %p289, %s23, 0
      %s291 = sadd.s32 %s290, %s288
      %s292 = smul.addr %s291, 8
      %s293 = scalar_lea.vmem %s0, %s292
      %p294 = scmp.lt.s32.totalorder %s22, 1
      %s295 = scalar_select %p294, %s22, 1
      %p296 = scmp.lt.s32.totalorder %s23, 0
      %s297 = scalar_select %p296, %s23, 0
      %s298 = sadd.s32 %s297, %s295
      %s299 = smul.addr %s298, 4
      %s300 = scalar_lea.vmem %s4, %s299
      %p301 = scmp.lt.s32.totalorder %s22, 1
      %s302 = scalar_select %p301, %s22, 1
      %p303 = scmp.lt.s32.totalorder %s23, 0
      %s304 = scalar_select %p303, %s23, 0
      %s305 = sadd.s32 %s304, %s302
      %s306 = smul.addr %s305, 4
      %s307 = scalar_lea.vmem %s5, %s306
      %p308 = scmp.lt.s32.totalorder %s22, 1
      %s309 = scalar_select %p308, %s22, 1
      %p310 = scmp.lt.s32.totalorder %s23, 0
      %s311 = scalar_select %p310, %s23, 0
      %s312 = sadd.s32 %s311, %s309
      %s313 = smul.addr %s312, 4
      %s314 = scalar_lea.vmem %s6, %s313
      %v316 = vld [vmem:[%s293] sm:$0xff]
      %v317 = vld [vmem:[%s1] sm:$0x1]
      %v318 = vld [vmem:[%s2] sm:$0x1]
      %vm319 = vcmask 261120
      %v320 = vsel %vm319, %v316, 0.0
      %321 = vadd.xlane.f32.xlu0 %v320
      %v322 = vpop.xlane.xlu0 %321
      %v323 = vrcp.pop 32.0
      %v324 = vmul.f32 %v322, %v323
      %v325 = vsub.f32 %v316, %v324
      %v326 = vmul.f32 %v325, %v325
      %v327 = vsel %vm319, %v326, 0.0
      %328 = vadd.xlane.f32.xlu0 %v327
      %v329 = vpop.xlane.xlu0 %328
      %v330 = vmul.f32 %v329, 0.032258064
      %v331 = vadd.f32 %v330, 1e-05
      %v332 = vrsqrt.pop %v331
      %v333 = vmul.f32 %v325, %v332
      %v335 = vlaneseq
      %v336 = vshrl.u32 %v335, 7
      %v337 = vsub.s32 0, %v336
      %v338 = vrot.slane %v317, %v337
      %v340 = vmul.f32 %v333, %v338
      %v342 = vlaneseq
      %v343 = vshrl.u32 %v342, 7
      %v344 = vsub.s32 0, %v343
      %v345 = vrot.slane %v318, %v344
      %v347 = vadd.f32 %v340, %v345
      %v348 = vpack.c.bf16 %v347, %v347
      %v349 = vld [vmem:[%s3] sm:$0xf]
      %v350 = vld [vmem:[%s3 + $0x4] sm:$0xf]
      %v351 = vld [vmem:[%s3 + $0x8] sm:$0xf]
      %v352 = vld [vmem:[%s3 + $0xc] sm:$0xf]
      %v357 = vunpack.c.l.b16 %v349
      %v358 = vunpack.c.l.b16 %v350
      %v359 = vunpack.c.l.b16 %v351
      %v360 = vunpack.c.l.b16 %v352
      %v361 = vpack.c.b16 %v358, %v357
      %v362 = vpack.c.b16 %v360, %v359
      %v366 = vsel %vm319, %v348, 0
      %368 = vmatprep.subr.bf16.mxu0 0
      %369 = vmatpush1.bf16.msra.mxu0 0
      %370 = vmatprep.subr.bf16.mxu0 0
      %371 = vmatpush1.bf16.msra.mxu0 0
      %372 = vmatprep.subr.bf16.mxu0 0
      %373 = vmatpush1.bf16.msra.mxu0 0
      %374 = vmatprep.subr.bf16.mxu0 0
      %375 = vmatpush1.bf16.msra.mxu0 0
      %376 = vmatprep.subr.bf16.mxu0 0
      %377 = vmatpush1.bf16.msra.mxu0 0
      %378 = vmatprep.subr.bf16.mxu0 0
      %379 = vmatpush1.bf16.msra.mxu0 0
      %380 = vmatprep.subr.bf16.mxu0 0
      %381 = vmatpush1.bf16.msra.mxu0 %v362
      %382 = vmatprep.subr.bf16.mxu0 0
      %383 = vmatpush1.bf16.msra.mxu0 %v361
      %384 = vmatprep.subr.bf16.mxu0 0
      %385 = vmatpush2.bf16.msra.mxu0 0
      %386 = vmatprep.subr.bf16.mxu0 0
      %387 = vmatpush2.bf16.msra.mxu0 0
      %388 = vmatprep.subr.bf16.mxu0 0
      %389 = vmatpush2.bf16.msra.mxu0 0
      %390 = vmatprep.subr.bf16.mxu0 0
      %391 = vmatpush2.bf16.msra.mxu0 0
      %392 = vmatprep.subr.bf16.mxu0 0
      %393 = vmatpush2.bf16.msra.mxu0 0
      %394 = vmatprep.subr.bf16.mxu0 0
      %395 = vmatpush2.bf16.msra.mxu0 0
      %396 = vmatprep.subr.bf16.mxu0 0
      %397 = vmatpush2.bf16.msra.mxu0 0
      %398 = vmatprep.subr.bf16.mxu0 0
      %399 = vmatpush2.bf16.msra.mxu0 0
      %400 = vmatprep.mubr.bf16.mxu0 0
      %401 = vmatmul.mubr.bf16.gmra.mxu0 %v366
      %v402 = vpop.f32.mrf.mxu0
      %v403 = vadd.f32 0.0, %v402
      %v404 = vpop.f32.mrf.mxu0
      %v405 = vpop.f32.mrf.mxu0
      %v406 = vpop.f32.mrf.mxu0
      %407 = vdwg.mxu0
      %v408 = vpack.c.bf16 %v403, %v403
      %vm409 = vcmask 257024
      %410 = vst.msk [vmem:[%s300] sm:$0xf] %vm409, %v408
      %v412 = vunpack.c.l.b16 %v408
      %v413 = vpack.c.b16 %v412, %v412
      %414 = vrot.lane.b32.xlu0 %v413, 96
      %v415 = vpop.permute.xlu0 %414
      %417 = vst.msk [vmem:[%s307] sm:$0xf] %vm409, %v415
      %418 = vrot.lane.b32.xlu0 %v413, 64
      %v419 = vpop.permute.xlu0 %418
      %421 = vst.msk [vmem:[%s314] sm:$0xf] %vm409, %v419
      %p422 = scmp.lt.s32.totalorder %s22, 1
      %s423 = scalar_select %p422, %s22, 1
      %p424 = scmp.lt.s32.totalorder %s23, 0
      %s425 = scalar_select %p424, %s23, 0
      %s426 = sadd.s32 %s425, %s423
      %s427 = smul.addr %s426, 4
      %s428 = scalar_lea.vmem %s4, %s427
      %p429 = scmp.lt.s32.totalorder %s22, 1
      %s430 = scalar_select %p429, %s22, 1
      %p431 = scmp.lt.s32.totalorder %s23, 0
      %s432 = scalar_select %p431, %s23, 0
      %s433 = sadd.s32 %s432, %s430
      %s434 = smul.addr %s433, 4
      %s435 = scalar_lea.vmem %s5, %s434
      %p436 = scmp.lt.s32.totalorder %s22, 1
      %s437 = scalar_select %p436, %s22, 1
      %p438 = scmp.lt.s32.totalorder %s23, 0
      %s439 = scalar_select %p438, %s23, 0
      %s440 = sadd.s32 %s439, %s437
      %s441 = smul.addr %s440, 4
      %s442 = scalar_lea.vmem %s6, %s441
      // Predicated region
      $region37: #{_nanogpt_block_impl.2} parent=35 // pred_check
        %p443 = pneg %p141
      $region38: #{_nanogpt_block_impl.2} parent=35 // pred_check_branch
        %445 = sbr.rel (%p443) target = $region40
      $region39: #{_nanogpt_block_impl.2} parent=35 // pred_region
        _
      $region40: #{_nanogpt_block_impl.2} parent=35 // pred_fallthru
        _
      // Predicated region
      $region41: #{_nanogpt_block_impl.2} parent=35 // pred_check
        %p446 = pneg %p169
      $region42: #{_nanogpt_block_impl.2} parent=35 // pred_check_branch
        %448 = sbr.rel (%p446) target = $region44
      $region43: #{_nanogpt_block_impl.2} parent=35 // pred_region
        _
      $region44: #{_nanogpt_block_impl.2} parent=35 // pred_fallthru
        _
      // Predicated region
      $region45: #{_nanogpt_block_impl.2} parent=35 // pred_check
        %p449 = pneg %p197
      $region46: #{_nanogpt_block_impl.2} parent=35 // pred_check_branch
        %451 = sbr.rel (%p449) target = $region48
      $region47: #{_nanogpt_block_impl.2} parent=35 // pred_region
        _
      $region48: #{_nanogpt_block_impl.2} parent=35 // pred_fallthru
        _
    $region36: #{_nanogpt_block_impl.2} parent=5 // pred_fallthru
      _
    %p452 = scmp.le.s32.totalorder 2, %s13
    // Predicated region
    $region49: #{_nanogpt_block_impl.2} parent=5 // pred_check
      %p453 = pneg %p452
    $region50: #{_nanogpt_block_impl.2} parent=5 // pred_check_branch
      %455 = sbr.rel (%p453) target = $region52
    $region51: #{_nanogpt_block_impl.2} parent=5 // pred_region
      %s456 = ssub.s32 %s13, 2
      // Predicated region
      $region53: #{_nanogpt_block_impl.2} parent=51 // pred_check
        %p457 = pneg %p147
      $region54: #{_nanogpt_block_impl.2} parent=51 // pred_check_branch
        %459 = sbr.rel (%p457) target = $region56
      $region55: #{_nanogpt_block_impl.2} parent=51 // pred_region
        %p460 = scmp.lt.s32.totalorder %s24, 1
        %s461 = scalar_select %p460, %s24, 1
        %p462 = scmp.lt.s32.totalorder %s25, 0
        %s463 = scalar_select %p462, %s25, 0
        %s464 = sadd.s32 %s463, %s461
        %s465 = smul.addr %s464, 4
        %s466 = scalar_lea.vmem %s4, %s465
      $region56: #{_nanogpt_block_impl.2} parent=51 // pred_fallthru
        _
      // Predicated region
      $region57: #{_nanogpt_block_impl.2} parent=51 // pred_check
        %p467 = pneg %p175
      $region58: #{_nanogpt_block_impl.2} parent=51 // pred_check_branch
        %469 = sbr.rel (%p467) target = $region60
      $region59: #{_nanogpt_block_impl.2} parent=51 // pred_region
        %p470 = scmp.lt.s32.totalorder %s24, 1
        %s471 = scalar_select %p470, %s24, 1
        %p472 = scmp.lt.s32.totalorder %s25, 0
        %s473 = scalar_select %p472, %s25, 0
        %s474 = sadd.s32 %s473, %s471
        %s475 = smul.addr %s474, 4
        %s476 = scalar_lea.vmem %s5, %s475
      $region60: #{_nanogpt_block_impl.2} parent=51 // pred_fallthru
        _
      // Predicated region
      $region61: #{_nanogpt_block_impl.2} parent=51 // pred_check
        %p477 = pneg %p203
      $region62: #{_nanogpt_block_impl.2} parent=51 // pred_check_branch
        %479 = sbr.rel (%p477) target = $region64
      $region63: #{_nanogpt_block_impl.2} parent=51 // pred_region
        %p480 = scmp.lt.s32.totalorder %s24, 1
        %s481 = scalar_select %p480, %s24, 1
        %p482 = scmp.lt.s32.totalorder %s25, 0
        %s483 = scalar_select %p482, %s25, 0
        %s484 = sadd.s32 %s483, %s481
        %s485 = smul.addr %s484, 4
        %s486 = scalar_lea.vmem %s6, %s485
      $region64: #{_nanogpt_block_impl.2} parent=51 // pred_fallthru
        _
    $region52: #{_nanogpt_block_impl.2} parent=5 // pred_fallthru
      _
  $region6: #{_nanogpt_block_impl.2} parent=0 // loop_footer
    %s17 = sadd.s32 1, %s13
  $region7: #{_nanogpt_block_impl.2} parent=0 // loop_footer_branch
    %12 = sbr.rel target = $region3
  $region8: #{_nanogpt_block_impl.2} parent=0 // loop_exit
    _

// kernel: _nanogpt_block_impl.3
$region0: #{_nanogpt_block_impl.3}
  #allocation0 [shape = 'u32[]', space=smem, size = 0x4, offset = 0x4, fixed_abs, tag = 'smem constant byte address 0x4 - core index']
  #allocation1 [shape = 'u32[144,128]{1,0:T(1,128)}', space=vmem, size = 0x12000, scoped, tag = 'internal scratch']
  #allocation2 [shape = 'f32[4,8,1]{2,1,0:T(8,128)}', space=vmem, size = 0x4000, scoped, tag = 'scratch operand']
  #allocation3 [shape = 'f32[4,8,1]{2,1,0:T(8,128)}', space=vmem, size = 0x4000, scoped, tag = 'scratch operand']
  #allocation4 [shape = 'f32[4,8,8]{2,1,0:T(8,128)}', space=vmem, size = 0x4000, scoped, tag = 'scratch operand']
  %s0 = inlined_call_operand.vmem [shape: f32[2,8,32], index: 0, kind: input, shape index: {}]
  %s1 = inlined_call_operand.vmem [shape: bf16[2,4,8,8], index: 1, kind: input, shape index: {}]
  %s2 = inlined_call_operand.vmem [shape: bf16[2,4,8,8], index: 2, kind: input, shape index: {}]
  %s3 = inlined_call_operand.vmem [shape: bf16[2,4,8,8], index: 3, kind: input, shape index: {}]
  %s4 = inlined_call_operand.vmem [shape: bf16[4,8,32], index: 4, kind: input, shape index: {}]
  %s5 = inlined_call_operand.vmem [shape: f32[1,32], index: 5, kind: input, shape index: {}]
  %s6 = inlined_call_operand.vmem [shape: f32[1,32], index: 6, kind: input, shape index: {}]
  %s7 = inlined_call_operand.vmem [shape: bf16[32,128], index: 7, kind: input, shape index: {}]
  %s8 = inlined_call_operand.vmem [shape: f32[1,128], index: 8, kind: input, shape index: {}]
  %s9 = inlined_call_operand.vmem [shape: bf16[128,32], index: 9, kind: input, shape index: {}]
  %s10 = inlined_call_operand.vmem [shape: f32[1,32], index: 10, kind: input, shape index: {}]
  %s11 = inlined_call_operand.hbm [shape: f32[2,8,32], index: 11, kind: output, shape index: {}]
  %s12 = sld [smem:[#allocation0]]
  $region89: #{_nanogpt_block_impl.3} parent=0
    _
  %s14 = ssub.s32 1, %s12
  %s15 = scalar_select 0, %s14, %s12
  $region1: #{_nanogpt_block_impl.3} parent=0
    #allocation5 [shape = 'u8[8192]{0}', space=vmem, size = 0x2000, scoped, tag = 'output window, operand 0']
    #allocation6 [shape = 's32[2]{0}', space=sflag, size = 0x8, scoped, tag = 'scoped memory for _nanogpt_block_impl.3']
    %16 = vsyncpa [#allocation6], 0
    %s17 = scalar_lea.sflag [#allocation6], 1
    %18 = vsyncpa %s17, 0
    loop: start=0, step=1, limit=4
    $region2: #{_nanogpt_block_impl.3} parent=1 // loop_pre_header
      _
    $region3: #{_nanogpt_block_impl.3} parent=1 // loop_header
      %s20 = sphi 0, %s24
      %p21 = scmp.ge.s32.totalorder %s20, 4
      %s27 = sphi 0, %s46
      %s28 = sphi 0, %s42
      %s29 = sphi 0, %s38
      %s30 = sphi 0, %s27
      %s31 = sphi 0, %s28
      %s32 = sphi 0, %s29
      %s33 = sphi 0, %s30
      %s34 = sphi 0, %s31
      %s35 = sphi 0, %s32
      %s51 = sphi 0, %s53
      %s54 = sphi 0, %s51
      %s55 = sphi 0, %s54
      %s71 = sphi 0, %s55
      %s79 = sphi 0, %s81
      %s82 = sphi 0, %s79
      %s83 = sphi 0, %s82
      %s99 = sphi 0, %s83
      %s111 = sphi 0, %s113
      %s114 = sphi 0, %s111
      %s115 = sphi 0, %s114
      %s131 = sphi 0, %s115
      %s143 = sphi 0, %s145
      %s146 = sphi 0, %s143
      %s147 = sphi 0, %s146
      %s163 = sphi 0, %s147
      %s167 = sphi 0, %s167
      %s169 = sphi 0, %s167
      %s170 = sphi 0, %s169
      %s184 = sphi 0, %s170
      %s188 = sphi 0, %s188
      %s190 = sphi 0, %s188
      %s191 = sphi 0, %s190
      %s205 = sphi 0, %s191
      %s209 = sphi 0, %s209
      %s211 = sphi 0, %s209
      %s212 = sphi 0, %s211
      %s226 = sphi 0, %s212
      %s230 = sphi 0, %s230
      %s232 = sphi 0, %s230
      %s233 = sphi 0, %s232
      %s247 = sphi 0, %s233
      %s251 = sphi 0, %s251
      %s253 = sphi 0, %s251
      %s254 = sphi 0, %s253
      %s268 = sphi 0, %s254
      %s272 = sphi 0, %s272
      %s274 = sphi 0, %s272
      %s275 = sphi 0, %s274
      %s289 = sphi 0, %s275
      %s293 = sphi 0, %s293
      %s295 = sphi 0, %s293
      %s296 = sphi 0, %s295
      %s310 = sphi 0, %s296
      %s318 = sphi 0, %s320
      %s321 = sphi 0, %s318
      %s322 = sphi 0, %s321
      %s338 = sphi 0, %s322
    $region4: #{_nanogpt_block_impl.3} parent=1 // loop_header_branch
      %23 = sbr.rel (%p21) target = $region8
    $region5: #{_nanogpt_block_impl.3} parent=1 // loop_body
      %s25 = ssub.s32 %s20, 1
      %s26 = ssub.s32 %s20, 2
      %s36 = sadd.s32 1, %s29
      %p37 = scmp.ge.s32.totalorder %s36, 1
      %s38 = scalar_select %p37, 0, %s36
      %s39 = sadd.s32 1, %s28
      %s40 = scalar_select %p37, %s39, %s28
      %p41 = scmp.ge.s32.totalorder %s40, 1
      %s42 = scalar_select %p41, 0, %s40
      %s43 = sadd.s32 1, %s27
      %s44 = scalar_select %p41, %s43, %s27
      %p45 = scmp.ge.s32.totalorder %s44, 2
      %s46 = scalar_select %p45, 0, %s44
      %s47 = ssub.s32 %s27, %s46
      %s48 = ssub.s32 %s28, %s42
      %s49 = sor.u32 %s47, %s48
      %p50 = scmp.eq.s32.totalorder %s49, 0
      %s52 = sadd.s32 %s51, 1
      %s53 = scalar_select %p50, %s51, %s52
      %p56 = pneg %p50
      %p57 = scmp.eq.s32.totalorder %s20, 1
      %p58 = por %p56, %p57
      %p59 = scmp.ne.s32.totalorder %s51, %s54
      %p60 = scmp.eq.s32.totalorder %s20, 0
      %p61 = por %p59, %p60
      %p62 = scmp.ne.s32.totalorder %s51, %s54
      %p63 = scmp.eq.s32.totalorder %s25, 1
      %p64 = por %p62, %p63
      %p65 = scmp.ne.s32.totalorder %s54, %s55
      %p66 = scmp.eq.s32.totalorder %s25, 0
      %p67 = por %p65, %p66
      %p68 = scmp.ne.s32.totalorder %s54, %s55
      %p69 = scmp.eq.s32.totalorder %s26, 1
      %p70 = por %p68, %p69
      %p72 = scmp.ne.s32.totalorder %s55, %s71
      %p73 = scmp.eq.s32.totalorder %s26, 0
      %p74 = por %p72, %p73
      %s75 = ssub.s32 %s27, %s46
      %s76 = ssub.s32 %s28, %s42
      %s77 = sor.u32 %s75, %s76
      %p78 = scmp.eq.s32.totalorder %s77, 0
      %s80 = sadd.s32 %s79, 1
      %s81 = scalar_select %p78, %s79, %s80
      %p84 = pneg %p78
      %p85 = scmp.eq.s32.totalorder %s20, 1
      %p86 = por %p84, %p85
      %p87 = scmp.ne.s32.totalorder %s79, %s82
      %p88 = scmp.eq.s32.totalorder %s20, 0
      %p89 = por %p87, %p88
      %p90 = scmp.ne.s32.totalorder %s79, %s82
      %p91 = scmp.eq.s32.totalorder %s25, 1
      %p92 = por %p90, %p91
      %p93 = scmp.ne.s32.totalorder %s82, %s83
      %p94 = scmp.eq.s32.totalorder %s25, 0
      %p95 = por %p93, %p94
      %p96 = scmp.ne.s32.totalorder %s82, %s83
      %p97 = scmp.eq.s32.totalorder %s26, 1
      %p98 = por %p96, %p97
      %p100 = scmp.ne.s32.totalorder %s83, %s99
      %p101 = scmp.eq.s32.totalorder %s26, 0
      %p102 = por %p100, %p101
      %p103 = scmp.lt.s32.totalorder %s29, %s28
      %s104 = scalar_select %p103, %s29, %s28
      %p105 = scmp.lt.s32.totalorder %s38, %s42
      %s106 = scalar_select %p105, %s38, %s42
      %s107 = ssub.s32 %s27, %s46
      %s108 = ssub.s32 %s104, %s106
      %s109 = sor.u32 %s107, %s108
      %p110 = scmp.eq.s32.totalorder %s109, 0
      %s112 = sadd.s32 %s111, 1
      %s113 = scalar_select %p110, %s111, %s112
      %p116 = pneg %p110
      %p117 = scmp.eq.s32.totalorder %s20, 1
      %p118 = por %p116, %p117
      %p119 = scmp.ne.s32.totalorder %s111, %s114
      %p120 = scmp.eq.s32.totalorder %s20, 0
      %p121 = por %p119, %p120
      %p122 = scmp.ne.s32.totalorder %s111, %s114
      %p123 = scmp.eq.s32.totalorder %s25, 1
      %p124 = por %p122, %p123
      %p125 = scmp.ne.s32.totalorder %s114, %s115
      %p126 = scmp.eq.s32.totalorder %s25, 0
      %p127 = por %p125, %p126
      %p128 = scmp.ne.s32.totalorder %s114, %s115
      %p129 = scmp.eq.s32.totalorder %s26, 1
      %p130 = por %p128, %p129
      %p132 = scmp.ne.s32.totalorder %s115, %s131
      %p133 = scmp.eq.s32.totalorder %s26, 0
      %p134 = por %p132, %p133
      %p135 = scmp.lt.s32.totalorder %s29, %s28
      %s136 = scalar_select %p135, %s29, %s28
      %p137 = scmp.lt.s32.totalorder %s38, %s42
      %s138 = scalar_select %p137, %s38, %s42
      %s139 = ssub.s32 %s27, %s46
      %s140 = ssub.s32 %s136, %s138
      %s141 = sor.u32 %s139, %s140
      %p142 = scmp.eq.s32.totalorder %s141, 0
      %s144 = sadd.s32 %s143, 1
      %s145 = scalar_select %p142, %s143, %s144
      %p148 = pneg %p142
      %p149 = scmp.eq.s32.totalorder %s20, 1
      %p150 = por %p148, %p149
      %p151 = scmp.ne.s32.totalorder %s143, %s146
      %p152 = scmp.eq.s32.totalorder %s20, 0
      %p153 = por %p151, %p152
      %p154 = scmp.ne.s32.totalorder %s143, %s146
      %p155 = scmp.eq.s32.totalorder %s25, 1
      %p156 = por %p154, %p155
      %p157 = scmp.ne.s32.totalorder %s146, %s147
      %p158 = scmp.eq.s32.totalorder %s25, 0
      %p159 = por %p157, %p158
      %p160 = scmp.ne.s32.totalorder %s146, %s147
      %p161 = scmp.eq.s32.totalorder %s26, 1
      %p162 = por %p160, %p161
      %p164 = scmp.ne.s32.totalorder %s147, %s163
      %p165 = scmp.eq.s32.totalorder %s26, 0
      %p166 = por %p164, %p165
      %s168 = sadd.s32 %s167, 1
      %p171 = scmp.eq.s32.totalorder %s20, 1
      %p172 = scmp.ne.s32.totalorder %s167, %s169
      %p173 = scmp.eq.s32.totalorder %s20, 0
      %p174 = por %p172, %p173
      %p175 = scmp.ne.s32.totalorder %s167, %s169
      %p176 = scmp.eq.s32.totalorder %s25, 1
      %p177 = por %p175, %p176
      %p178 = scmp.ne.s32.totalorder %s169, %s170
      %p179 = scmp.eq.s32.totalorder %s25, 0
      %p180 = por %p178, %p179
      %p181 = scmp.ne.s32.totalorder %s169, %s170
      %p182 = scmp.eq.s32.totalorder %s26, 1
      %p183 = por %p181, %p182
      %p185 = scmp.ne.s32.totalorder %s170, %s184
      %p186 = scmp.eq.s32.totalorder %s26, 0
      %p187 = por %p185, %p186
      %s189 = sadd.s32 %s188, 1
      %p192 = scmp.eq.s32.totalorder %s20, 1
      %p193 = scmp.ne.s32.totalorder %s188, %s190
      %p194 = scmp.eq.s32.totalorder %s20, 0
      %p195 = por %p193, %p194
      %p196 = scmp.ne.s32.totalorder %s188, %s190
      %p197 = scmp.eq.s32.totalorder %s25, 1
      %p198 = por %p196, %p197
      %p199 = scmp.ne.s32.totalorder %s190, %s191
      %p200 = scmp.eq.s32.totalorder %s25, 0
      %p201 = por %p199, %p200
      %p202 = scmp.ne.s32.totalorder %s190, %s191
      %p203 = scmp.eq.s32.totalorder %s26, 1
      %p204 = por %p202, %p203
      %p206 = scmp.ne.s32.totalorder %s191, %s205
      %p207 = scmp.eq.s32.totalorder %s26, 0
      %p208 = por %p206, %p207
      %s210 = sadd.s32 %s209, 1
      %p213 = scmp.eq.s32.totalorder %s20, 1
      %p214 = scmp.ne.s32.totalorder %s209, %s211
      %p215 = scmp.eq.s32.totalorder %s20, 0
      %p216 = por %p214, %p215
      %p217 = scmp.ne.s32.totalorder %s209, %s211
      %p218 = scmp.eq.s32.totalorder %s25, 1
      %p219 = por %p217, %p218
      %p220 = scmp.ne.s32.totalorder %s211, %s212
      %p221 = scmp.eq.s32.totalorder %s25, 0
      %p222 = por %p220, %p221
      %p223 = scmp.ne.s32.totalorder %s211, %s212
      %p224 = scmp.eq.s32.totalorder %s26, 1
      %p225 = por %p223, %p224
      %p227 = scmp.ne.s32.totalorder %s212, %s226
      %p228 = scmp.eq.s32.totalorder %s26, 0
      %p229 = por %p227, %p228
      %s231 = sadd.s32 %s230, 1
      %p234 = scmp.eq.s32.totalorder %s20, 1
      %p235 = scmp.ne.s32.totalorder %s230, %s232
      %p236 = scmp.eq.s32.totalorder %s20, 0
      %p237 = por %p235, %p236
      %p238 = scmp.ne.s32.totalorder %s230, %s232
      %p239 = scmp.eq.s32.totalorder %s25, 1
      %p240 = por %p238, %p239
      %p241 = scmp.ne.s32.totalorder %s232, %s233
      %p242 = scmp.eq.s32.totalorder %s25, 0
      %p243 = por %p241, %p242
      %p244 = scmp.ne.s32.totalorder %s232, %s233
      %p245 = scmp.eq.s32.totalorder %s26, 1
      %p246 = por %p244, %p245
      %p248 = scmp.ne.s32.totalorder %s233, %s247
      %p249 = scmp.eq.s32.totalorder %s26, 0
      %p250 = por %p248, %p249
      %s252 = sadd.s32 %s251, 1
      %p255 = scmp.eq.s32.totalorder %s20, 1
      %p256 = scmp.ne.s32.totalorder %s251, %s253
      %p257 = scmp.eq.s32.totalorder %s20, 0
      %p258 = por %p256, %p257
      %p259 = scmp.ne.s32.totalorder %s251, %s253
      %p260 = scmp.eq.s32.totalorder %s25, 1
      %p261 = por %p259, %p260
      %p262 = scmp.ne.s32.totalorder %s253, %s254
      %p263 = scmp.eq.s32.totalorder %s25, 0
      %p264 = por %p262, %p263
      %p265 = scmp.ne.s32.totalorder %s253, %s254
      %p266 = scmp.eq.s32.totalorder %s26, 1
      %p267 = por %p265, %p266
      %p269 = scmp.ne.s32.totalorder %s254, %s268
      %p270 = scmp.eq.s32.totalorder %s26, 0
      %p271 = por %p269, %p270
      %s273 = sadd.s32 %s272, 1
      %p276 = scmp.eq.s32.totalorder %s20, 1
      %p277 = scmp.ne.s32.totalorder %s272, %s274
      %p278 = scmp.eq.s32.totalorder %s20, 0
      %p279 = por %p277, %p278
      %p280 = scmp.ne.s32.totalorder %s272, %s274
      %p281 = scmp.eq.s32.totalorder %s25, 1
      %p282 = por %p280, %p281
      %p283 = scmp.ne.s32.totalorder %s274, %s275
      %p284 = scmp.eq.s32.totalorder %s25, 0
      %p285 = por %p283, %p284
      %p286 = scmp.ne.s32.totalorder %s274, %s275
      %p287 = scmp.eq.s32.totalorder %s26, 1
      %p288 = por %p286, %p287
      %p290 = scmp.ne.s32.totalorder %s275, %s289
      %p291 = scmp.eq.s32.totalorder %s26, 0
      %p292 = por %p290, %p291
      %s294 = sadd.s32 %s293, 1
      %p297 = scmp.eq.s32.totalorder %s20, 1
      %p298 = scmp.ne.s32.totalorder %s293, %s295
      %p299 = scmp.eq.s32.totalorder %s20, 0
      %p300 = por %p298, %p299
      %p301 = scmp.ne.s32.totalorder %s293, %s295
      %p302 = scmp.eq.s32.totalorder %s25, 1
      %p303 = por %p301, %p302
      %p304 = scmp.ne.s32.totalorder %s295, %s296
      %p305 = scmp.eq.s32.totalorder %s25, 0
      %p306 = por %p304, %p305
      %p307 = scmp.ne.s32.totalorder %s295, %s296
      %p308 = scmp.eq.s32.totalorder %s26, 1
      %p309 = por %p307, %p308
      %p311 = scmp.ne.s32.totalorder %s296, %s310
      %p312 = scmp.eq.s32.totalorder %s26, 0
      %p313 = por %p311, %p312
      %s314 = ssub.s32 %s27, %s46
      %s315 = ssub.s32 %s28, %s42
      %s316 = sor.u32 %s314, %s315
      %p317 = scmp.eq.s32.totalorder %s316, 0
      %s319 = sadd.s32 %s318, 1
      %s320 = scalar_select %p317, %s318, %s319
      %p323 = pneg %p317
      %p324 = scmp.eq.s32.totalorder %s20, 1
      %p325 = por %p323, %p324
      %p326 = scmp.ne.s32.totalorder %s318, %s321
      %p327 = scmp.eq.s32.totalorder %s20, 0
      %p328 = por %p326, %p327
      %p329 = scmp.ne.s32.totalorder %s318, %s321
      %p330 = scmp.eq.s32.totalorder %s25, 1
      %p331 = por %p329, %p330
      %p332 = scmp.ne.s32.totalorder %s321, %s322
      %p333 = scmp.eq.s32.totalorder %s25, 0
      %p334 = por %p332, %p333
      %p335 = scmp.ne.s32.totalorder %s321, %s322
      %p336 = scmp.eq.s32.totalorder %s26, 1
      %p337 = por %p335, %p336
      %p339 = scmp.ne.s32.totalorder %s322, %s338
      %p340 = scmp.eq.s32.totalorder %s26, 0
      %p341 = por %p339, %p340
      %p342 = scmp.le.s32.totalorder 1, %s20
      %p343 = scmp.lt.s32.totalorder %s20, 3
      %p344 = pnand %p342, %p343
      %p345 = pneg %p344
      // Predicated region
      $region9: #{_nanogpt_block_impl.3} parent=5 // pred_check
        _
      $region10: #{_nanogpt_block_impl.3} parent=5 // pred_check_branch
        %347 = sbr.rel (%p344) target = $region12
      $region11: #{_nanogpt_block_impl.3} parent=5 // pred_region
        %s348 = ssub.s32 %s20, 1
        // Predicated region
        $region13: #{_nanogpt_block_impl.3} parent=11 // pred_check
          %p349 = pneg %p180
        $region14: #{_nanogpt_block_impl.3} parent=11 // pred_check_branch
          %351 = sbr.rel (%p349) target = $region16
        $region15: #{_nanogpt_block_impl.3} parent=11 // pred_region
          _
        $region16: #{_nanogpt_block_impl.3} parent=11 // pred_fallthru
          _
        // Predicated region
        $region17: #{_nanogpt_block_impl.3} parent=11 // pred_check
          %p352 = pneg %p201
        $region18: #{_nanogpt_block_impl.3} parent=11 // pred_check_branch
          %354 = sbr.rel (%p352) target = $region20
        $region19: #{_nanogpt_block_impl.3} parent=11 // pred_region
          _
        $region20: #{_nanogpt_block_impl.3} parent=11 // pred_fallthru
          _
        // Predicated region
        $region21: #{_nanogpt_block_impl.3} parent=11 // pred_check
          %p355 = pneg %p222
        $region22: #{_nanogpt_block_impl.3} parent=11 // pred_check_branch
          %357 = sbr.rel (%p355) target = $region24
        $region23: #{_nanogpt_block_impl.3} parent=11 // pred_region
          _
        $region24: #{_nanogpt_block_impl.3} parent=11 // pred_fallthru
          _
        // Predicated region
        $region25: #{_nanogpt_block_impl.3} parent=11 // pred_check
          %p358 = pneg %p243
        $region26: #{_nanogpt_block_impl.3} parent=11 // pred_check_branch
          %360 = sbr.rel (%p358) target = $region28
        $region27: #{_nanogpt_block_impl.3} parent=11 // pred_region
          _
        $region28: #{_nanogpt_block_impl.3} parent=11 // pred_fallthru
          _
        // Predicated region
        $region29: #{_nanogpt_block_impl.3} parent=11 // pred_check
          %p361 = pneg %p264
        $region30: #{_nanogpt_block_impl.3} parent=11 // pred_check_branch
          %363 = sbr.rel (%p361) target = $region32
        $region31: #{_nanogpt_block_impl.3} parent=11 // pred_region
          _
        $region32: #{_nanogpt_block_impl.3} parent=11 // pred_fallthru
          _
        // Predicated region
        $region33: #{_nanogpt_block_impl.3} parent=11 // pred_check
          %p364 = pneg %p285
        $region34: #{_nanogpt_block_impl.3} parent=11 // pred_check_branch
          %366 = sbr.rel (%p364) target = $region36
        $region35: #{_nanogpt_block_impl.3} parent=11 // pred_region
          _
        $region36: #{_nanogpt_block_impl.3} parent=11 // pred_fallthru
          _
        // Predicated region
        $region37: #{_nanogpt_block_impl.3} parent=11 // pred_check
          %p367 = pneg %p306
        $region38: #{_nanogpt_block_impl.3} parent=11 // pred_check_branch
          %369 = sbr.rel (%p367) target = $region40
        $region39: #{_nanogpt_block_impl.3} parent=11 // pred_region
          _
        $region40: #{_nanogpt_block_impl.3} parent=11 // pred_fallthru
          _
      $region12: #{_nanogpt_block_impl.3} parent=5 // pred_fallthru
        _
      %p370 = scmp.lt.s32.totalorder %s20, 2
      // Predicated region
      $region41: #{_nanogpt_block_impl.3} parent=5 // pred_check
        %p371 = pneg %p370
      $region42: #{_nanogpt_block_impl.3} parent=5 // pred_check_branch
        %373 = sbr.rel (%p371) target = $region44
      $region43: #{_nanogpt_block_impl.3} parent=5 // pred_region
        // Predicated region
        $region45: #{_nanogpt_block_impl.3} parent=43 // pred_check
          %p374 = pneg %p61
        $region46: #{_nanogpt_block_impl.3} parent=43 // pred_check_branch
          %376 = sbr.rel (%p374) target = $region48
        $region47: #{_nanogpt_block_impl.3} parent=43 // pred_region
          %p377 = scmp.lt.s32.totalorder %s27, 1
          %s378 = scalar_select %p377, %s27, 1
          %p379 = scmp.lt.s32.totalorder %s28, 0
          %s380 = scalar_select %p379, %s28, 0
          %s381 = sadd.s32 %s380, %s378
          %s382 = smul.addr %s381, 8
          %s383 = scalar_lea.vmem %s0, %s382
        $region48: #{_nanogpt_block_impl.3} parent=43 // pred_fallthru
          _
        // Predicated region
        $region49: #{_nanogpt_block_impl.3} parent=43 // pred_check
          %p384 = pneg %p89
        $region50: #{_nanogpt_block_impl.3} parent=43 // pred_check_branch
          %386 = sbr.rel (%p384) target = $region52
        $region51: #{_nanogpt_block_impl.3} parent=43 // pred_region
          %p387 = scmp.lt.s32.totalorder %s27, 1
          %s388 = scalar_select %p387, %s27, 1
          %p389 = scmp.lt.s32.totalorder %s28, 0
          %s390 = scalar_select %p389, %s28, 0
          %s391 = smul.addr %s388, 4
          %s392 = sadd.s32 %s390, %s391
          %s393 = smul.addr %s392, 4
          %s394 = scalar_lea.vmem %s1, %s393
        $region52: #{_nanogpt_block_impl.3} parent=43 // pred_fallthru
          _
        // Predicated region
        $region53: #{_nanogpt_block_impl.3} parent=43 // pred_check
          %p395 = pneg %p121
        $region54: #{_nanogpt_block_impl.3} parent=43 // pred_check_branch
          %397 = sbr.rel (%p395) target = $region56
        $region55: #{_nanogpt_block_impl.3} parent=43 // pred_region
          %p398 = scmp.lt.s32.totalorder %s29, %s28
          %s399 = scalar_select %p398, %s29, %s28
          %p400 = scmp.lt.s32.totalorder %s27, 1
          %s401 = scalar_select %p400, %s27, 1
          %p402 = scmp.lt.s32.totalorder %s399, 0
          %s403 = scalar_select %p402, %s399, 0
          %s404 = smul.addr %s401, 4
          %s405 = sadd.s32 %s403, %s404
          %s406 = smul.addr %s405, 4
          %s407 = scalar_lea.vmem %s2, %s406
          %p408 = scmp.lt.s32.totalorder %s29, %s28
          %s409 = scalar_select %p408, %s29, %s28
        $region56: #{_nanogpt_block_impl.3} parent=43 // pred_fallthru
          _
        // Predicated region
        $region57: #{_nanogpt_block_impl.3} parent=43 // pred_check
          %p410 = pneg %p153
        $region58: #{_nanogpt_block_impl.3} parent=43 // pred_check_branch
          %412 = sbr.rel (%p410) target = $region60
        $region59: #{_nanogpt_block_impl.3} parent=43 // pred_region
          %p413 = scmp.lt.s32.totalorder %s29, %s28
          %s414 = scalar_select %p413, %s29, %s28
          %p415 = scmp.lt.s32.totalorder %s27, 1
          %s416 = scalar_select %p415, %s27, 1
          %p417 = scmp.lt.s32.totalorder %s414, 0
          %s418 = scalar_select %p417, %s414, 0
          %s419 = smul.addr %s416, 4
          %s420 = sadd.s32 %s418, %s419
          %s421 = smul.addr %s420, 4
          %s422 = scalar_lea.vmem %s3, %s421
          %p423 = scmp.lt.s32.totalorder %s29, %s28
          %s424 = scalar_select %p423, %s29, %s28
        $region60: #{_nanogpt_block_impl.3} parent=43 // pred_fallthru
          _
      $region44: #{_nanogpt_block_impl.3} parent=5 // pred_fallthru
        _
      %p425 = scmp.le.s32.totalorder 1, %s20
      %p426 = scmp.lt.s32.totalorder %s20, 3
      %p427 = pnand %p425, %p426
      %p428 = pneg %p427
      // Predicated region
      $region61: #{_nanogpt_block_impl.3} parent=5 // pred_check
        _
      $region62: #{_nanogpt_block_impl.3} parent=5 // pred_check_branch
        %430 = sbr.rel (%p427) target = $region64
      $region63: #{_nanogpt_block_impl.3} parent=5 // pred_region
        %s431 = ssub.s32 %s20, 1
        %p432 = scmp.lt.s32.totalorder %s30, 1
        %s433 = scalar_select %p432, %s30, 1
        %p434 = scmp.lt.s32.totalorder %s31, 0
        %s435 = scalar_select %p434, %s31, 0
        %s436 = sadd.s32 %s435, %s433
        %s437 = smul.addr %s436, 8
        %s438 = scalar_lea.vmem %s0, %s437
        %p439 = pneg %p67
        %p440 = pneg %p64
        %p441 = scmp.lt.s32.totalorder %s30, 1
        %s442 = scalar_select %p441, %s30, 1
        %p443 = scmp.lt.s32.totalorder %s31, 0
        %s444 = scalar_select %p443, %s31, 0
        %s445 = smul.addr %s442, 4
        %s446 = sadd.s32 %s444, %s445
        %s447 = smul.addr %s446, 4
        %s448 = scalar_lea.vmem %s1, %s447
        %p449 = pneg %p95
        %p450 = pneg %p92
        %p451 = scmp.lt.s32.totalorder %s32, %s31
        %s452 = scalar_select %p451, %s32, %s31
        %p453 = scmp.lt.s32.totalorder %s30, 1
        %s454 = scalar_select %p453, %s30, 1
        %p455 = scmp.lt.s32.totalorder %s452, 0
        %s456 = scalar_select %p455, %s452, 0
        %s457 = smul.addr %s454, 4
        %s458 = sadd.s32 %s456, %s457
        %s459 = smul.addr %s458, 4
        %s460 = scalar_lea.vmem %s2, %s459
        %p461 = pneg %p127
        %p462 = pneg %p124
        %p463 = scmp.lt.s32.totalorder %s32, %s31
        %s464 = scalar_select %p463, %s32, %s31
        %p465 = scmp.lt.s32.totalorder %s30, 1
        %s466 = scalar_select %p465, %s30, 1
        %p467 = scmp.lt.s32.totalorder %s464, 0
        %s468 = scalar_select %p467, %s464, 0
        %s469 = smul.addr %s466, 4
        %s470 = sadd.s32 %s468, %s469
        %s471 = smul.addr %s470, 4
        %s472 = scalar_lea.vmem %s3, %s471
        %p473 = pneg %p159
        %p474 = pneg %p156
        %p475 = pneg %p180
        %p476 = pneg %p177
        %p477 = pneg %p201
        %p478 = pneg %p198
        %p479 = pneg %p222
        %p480 = pneg %p219
        %p481 = pneg %p243
        %p482 = pneg %p240
        %p483 = pneg %p264
        %p484 = pneg %p261
        %p485 = pneg %p285
        %p486 = pneg %p282
        %p487 = pneg %p306
        %p488 = pneg %p303
        %p489 = pneg %p334
        %p490 = pneg %p331
        %s491 = sand.u32 %s321, 1
        %s492 = scalar_lea.sflag [#allocation6], %s491
        %s493 = sand.u32 %s321, 1
        %s494 = smul.addr %s493, 8
        %s495 = scalar_lea.vmem [#allocation5], %s494
        %p496 = scmp.lt.s32.totalorder %s30, 1
        %s497 = scalar_select %p496, %s30, 1
        %p498 = scmp.lt.s32.totalorder %s31, 0
        %s499 = scalar_select %p498, %s31, 0
        %s500 = sadd.s32 %s499, %s497
        %s501 = smul.addr %s500, 8
        %s502 = scalar_lea.vmem %s0, %s501
        %p503 = scmp.lt.s32.totalorder %s30, 1
        %s504 = scalar_select %p503, %s30, 1
        %p505 = scmp.lt.s32.totalorder %s31, 0
        %s506 = scalar_select %p505, %s31, 0
        %s507 = smul.addr %s504, 4
        %s508 = sadd.s32 %s506, %s507
        %s509 = smul.addr %s508, 4
        %s510 = scalar_lea.vmem %s1, %s509
        %p511 = scmp.lt.s32.totalorder %s32, %s31
        %s512 = scalar_select %p511, %s32, %s31
        %p513 = scmp.lt.s32.totalorder %s30, 1
        %s514 = scalar_select %p513, %s30, 1
        %p515 = scmp.lt.s32.totalorder %s512, 0
        %s516 = scalar_select %p515, %s512, 0
        %s517 = smul.addr %s514, 4
        %s518 = sadd.s32 %s516, %s517
        %s519 = smul.addr %s518, 4
        %s520 = scalar_lea.vmem %s2, %s519
        %p521 = scmp.lt.s32.totalorder %s32, %s31
        %s522 = scalar_select %p521, %s32, %s31
        %p523 = scmp.lt.s32.totalorder %s32, %s31
        %s524 = scalar_select %p523, %s32, %s31
        %p525 = scmp.lt.s32.totalorder %s30, 1
        %s526 = scalar_select %p525, %s30, 1
        %p527 = scmp.lt.s32.totalorder %s524, 0
        %s528 = scalar_select %p527, %s524, 0
        %s529 = smul.addr %s526, 4
        %s530 = sadd.s32 %s528, %s529
        %s531 = smul.addr %s530, 4
        %s532 = scalar_lea.vmem %s3, %s531
        %p533 = scmp.lt.s32.totalorder %s32, %s31
        %s534 = scalar_select %p533, %s32, %s31
        %p536 = scmp.eq.s32.totalorder %s32, 0
        // Predicated region
        $region65: #{_nanogpt_block_impl.3} parent=63 // pred_check
          %p537 = pneg %p536
        $region66: #{_nanogpt_block_impl.3} parent=63 // pred_check_branch
          %539 = sbr.rel (%p537) target = $region68
        $region67: #{_nanogpt_block_impl.3} parent=63 // pred_region
          %vm540 = vcmask 7168
          %541 = vst.msk [vmem:[#allocation2] sm:$0xff] %vm540, -inf
          %542 = vst.msk [vmem:[#allocation2 + $0x8] sm:$0xff] %vm540, -inf
          %543 = vst.msk [vmem:[#allocation2 + $0x10] sm:$0xff] %vm540, -inf
          %544 = vst.msk [vmem:[#allocation2 + $0x18] sm:$0xff] %vm540, -inf
          %545 = vst.msk [vmem:[#allocation3] sm:$0xff] %vm540, 0.0
          %546 = vst.msk [vmem:[#allocation3 + $0x8] sm:$0xff] %vm540, 0.0
          %547 = vst.msk [vmem:[#allocation3 + $0x10] sm:$0xff] %vm540, 0.0
          %548 = vst.msk [vmem:[#allocation3 + $0x18] sm:$0xff] %vm540, 0.0
          %vm549 = vcmask 64512
          %550 = vst.msk [vmem:[#allocation4] sm:$0xff] %vm549, 0.0
          %551 = vst.msk [vmem:[#allocation4 + $0x8] sm:$0xff] %vm549, 0.0
          %552 = vst.msk [vmem:[#allocation4 + $0x10] sm:$0xff] %vm549, 0.0
          %553 = vst.msk [vmem:[#allocation4 + $0x18] sm:$0xff] %vm549, 0.0
        $region68: #{_nanogpt_block_impl.3} parent=63 // pred_fallthru
          _
        %p554 = scmp.le.s32.totalorder %s32, %s31
        // Predicated region
        $region69: #{_nanogpt_block_impl.3} parent=63 // pred_check
          %p555 = pneg %p554
        $region70: #{_nanogpt_block_impl.3} parent=63 // pred_check_branch
          %557 = sbr.rel (%p555) target = $region72
        $region71: #{_nanogpt_block_impl.3} parent=63 // pred_region
          %v558 = vld [vmem:[%s510] sm:$0xf]
          %v559 = vld [vmem:[%s510 + $0x4] sm:$0xf]
          %v560 = vld [vmem:[%s510 + $0x8] sm:$0xf]
          %v561 = vld [vmem:[%s510 + $0xc] sm:$0xf]
          %v562 = vld [vmem:[%s520] sm:$0xf]
          %v563 = vld [vmem:[%s520 + $0x4] sm:$0xf]
          %v564 = vld [vmem:[%s520 + $0x8] sm:$0xf]
          %v565 = vld [vmem:[%s520 + $0xc] sm:$0xf]
          %v566 = vld [vmem:[%s532] sm:$0xf]
          %v567 = vld [vmem:[%s532 + $0x4] sm:$0xf]
          %v568 = vld [vmem:[%s532 + $0x8] sm:$0xf]
          %v569 = vld [vmem:[%s532 + $0xc] sm:$0xf]
          %vm570 = vcmask 64512
          %v572 = vsel %vm570, %v558, 0
          %v575 = vsel %vm570, %v562, 0
          %577 = vmatprep.subr.bf16.mxu0 0
          %578 = vmatpush1.bf16.xpose.msra.mxu0 0
          %579 = vmatprep.subr.bf16.mxu0 0
          %580 = vmatpush1.bf16.xpose.msra.mxu0 0
          %581 = vmatprep.subr.bf16.mxu0 0
          %582 = vmatpush1.bf16.xpose.msra.mxu0 0
          %583 = vmatprep.subr.bf16.mxu0 0
          %584 = vmatpush1.bf16.xpose.msra.mxu0 0
          %585 = vmatprep.subr.bf16.mxu0 0
          %586 = vmatpush1.bf16.xpose.msra.mxu0 0
          %587 = vmatprep.subr.bf16.mxu0 0
          %588 = vmatpush1.bf16.xpose.msra.mxu0 0
          %589 = vmatprep.subr.bf16.mxu0 0
          %590 = vmatpush1.bf16.xpose.msra.mxu0 0
          %591 = vmatprep.subr.bf16.mxu0 0
          %592 = vmatpush1.bf16.xpose.msra.mxu0 %v575
          %593 = vmatprep.subr.bf16.mxu0 0
          %594 = vmatpush2.bf16.xpose.msra.mxu0 0
          %595 = vmatprep.subr.bf16.mxu0 0
          %596 = vmatpush2.bf16.xpose.msra.mxu0 0
          %597 = vmatprep.subr.bf16.mxu0 0
          %598 = vmatpush2.bf16.xpose.msra.mxu0 0
          %599 = vmatprep.subr.bf16.mxu0 0
          %600 = vmatpush2.bf16.xpose.msra.mxu0 0
          %601 = vmatprep.subr.bf16.mxu0 0
          %602 = vmatpush2.bf16.xpose.msra.mxu0 0
          %603 = vmatprep.subr.bf16.mxu0 0
          %604 = vmatpush2.bf16.xpose.msra.mxu0 0
          %605 = vmatprep.subr.bf16.mxu0 0
          %606 = vmatpush2.bf16.xpose.msra.mxu0 0
          %607 = vmatprep.subr.bf16.mxu0 0
          %608 = vmatpush2.bf16.xpose.msra.mxu0 0
          %609 = vmatprep.mubr.bf16.mxu0 0
          %610 = vmatmul.mubr.bf16.gmra.mxu0 %v572
          %v611 = vpop.f32.mrf.mxu0
          %v612 = vadd.f32 0.0, %v611
          %v613 = vpop.f32.mrf.mxu0
          %v614 = vpop.f32.mrf.mxu0
          %v615 = vpop.f32.mrf.mxu0
          %616 = vdwg.mxu0
          %v618 = vsel %vm570, %v559, 0
          %v621 = vsel %vm570, %v563, 0
          %623 = vmatprep.subr.bf16.mxu0 0
          %624 = vmatpush1.bf16.xpose.msra.mxu0 0
          %625 = vmatprep.subr.bf16.mxu0 0
          %626 = vmatpush1.bf16.xpose.msra.mxu0 0
          %627 = vmatprep.subr.bf16.mxu0 0
          %628 = vmatpush1.bf16.xpose.msra.mxu0 0
          %629 = vmatprep.subr.bf16.mxu0 0
          %630 = vmatpush1.bf16.xpose.msra.mxu0 0
          %631 = vmatprep.subr.bf16.mxu0 0
          %632 = vmatpush1.bf16.xpose.msra.mxu0 0
          %633 = vmatprep.subr.bf16.mxu0 0
          %634 = vmatpush1.bf16.xpose.msra.mxu0 0
          %635 = vmatprep.subr.bf16.mxu0 0
          %636 = vmatpush1.bf16.xpose.msra.mxu0 0
          %637 = vmatprep.subr.bf16.mxu0 0
          %638 = vmatpush1.bf16.xpose.msra.mxu0 %v621
          %639 = vmatprep.subr.bf16.mxu0 0
          %640 = vmatpush2.bf16.xpose.msra.mxu0 0
          %641 = vmatprep.subr.bf16.mxu0 0
          %642 = vmatpush2.bf16.xpose.msra.mxu0 0
          %643 = vmatprep.subr.bf16.mxu0 0
          %644 = vmatpush2.bf16.xpose.msra.mxu0 0
          %645 = vmatprep.subr.bf16.mxu0 0
          %646 = vmatpush2.bf16.xpose.msra.mxu0 0
          %647 = vmatprep.subr.bf16.mxu0 0
          %648 = vmatpush2.bf16.xpose.msra.mxu0 0
          %649 = vmatprep.subr.bf16.mxu0 0
          %650 = vmatpush2.bf16.xpose.msra.mxu0 0
          %651 = vmatprep.subr.bf16.mxu0 0
          %652 = vmatpush2.bf16.xpose.msra.mxu0 0
          %653 = vmatprep.subr.bf16.mxu0 0
          %654 = vmatpush2.bf16.xpose.msra.mxu0 0
          %655 = vmatprep.mubr.bf16.mxu0 0
          %656 = vmatmul.mubr.bf16.gmra.mxu0 %v618
          %v657 = vpop.f32.mrf.mxu0
          %v658 = vadd.f32 0.0, %v657
          %v659 = vpop.f32.mrf.mxu0
          %v660 = vpop.f32.mrf.mxu0
          %v661 = vpop.f32.mrf.mxu0
          %662 = vdwg.mxu0
          %v664 = vsel %vm570, %v560, 0
          %v667 = vsel %vm570, %v564, 0
          %669 = vmatprep.subr.bf16.mxu0 0
          %670 = vmatpush1.bf16.xpose.msra.mxu0 0
          %671 = vmatprep.subr.bf16.mxu0 0
          %672 = vmatpush1.bf16.xpose.msra.mxu0 0
          %673 = vmatprep.subr.bf16.mxu0 0
          %674 = vmatpush1.bf16.xpose.msra.mxu0 0
          %675 = vmatprep.subr.bf16.mxu0 0
          %676 = vmatpush1.bf16.xpose.msra.mxu0 0
          %677 = vmatprep.subr.bf16.mxu0 0
          %678 = vmatpush1.bf16.xpose.msra.mxu0 0
          %679 = vmatprep.subr.bf16.mxu0 0
          %680 = vmatpush1.bf16.xpose.msra.mxu0 0
          %681 = vmatprep.subr.bf16.mxu0 0
          %682 = vmatpush1.bf16.xpose.msra.mxu0 0
          %683 = vmatprep.subr.bf16.mxu0 0
          %684 = vmatpush1.bf16.xpose.msra.mxu0 %v667
          %685 = vmatprep.subr.bf16.mxu0 0
          %686 = vmatpush2.bf16.xpose.msra.mxu0 0
          %687 = vmatprep.subr.bf16.mxu0 0
          %688 = vmatpush2.bf16.xpose.msra.mxu0 0
          %689 = vmatprep.subr.bf16.mxu0 0
          %690 = vmatpush2.bf16.xpose.msra.mxu0 0
          %691 = vmatprep.subr.bf16.mxu0 0
          %692 = vmatpush2.bf16.xpose.msra.mxu0 0
          %693 = vmatprep.subr.bf16.mxu0 0
          %694 = vmatpush2.bf16.xpose.msra.mxu0 0
          %695 = vmatprep.subr.bf16.mxu0 0
          %696 = vmatpush2.bf16.xpose.msra.mxu0 0
          %697 = vmatprep.subr.bf16.mxu0 0
          %698 = vmatpush2.bf16.xpose.msra.mxu0 0
          %699 = vmatprep.subr.bf16.mxu0 0
          %700 = vmatpush2.bf16.xpose.msra.mxu0 0
          %701 = vmatprep.mubr.bf16.mxu0 0
          %702 = vmatmul.mubr.bf16.gmra.mxu0 %v664
          %v703 = vpop.f32.mrf.mxu0
          %v704 = vadd.f32 0.0, %v703
          %v705 = vpop.f32.mrf.mxu0
          %v706 = vpop.f32.mrf.mxu0
          %v707 = vpop.f32.mrf.mxu0
          %708 = vdwg.mxu0
          %v710 = vsel %vm570, %v561, 0
          %v713 = vsel %vm570, %v565, 0
          %715 = vmatprep.subr.bf16.mxu0 0
          %716 = vmatpush1.bf16.xpose.msra.mxu0 0
          %717 = vmatprep.subr.bf16.mxu0 0
          %718 = vmatpush1.bf16.xpose.msra.mxu0 0
          %719 = vmatprep.subr.bf16.mxu0 0
          %720 = vmatpush1.bf16.xpose.msra.mxu0 0
          %721 = vmatprep.subr.bf16.mxu0 0
          %722 = vmatpush1.bf16.xpose.msra.mxu0 0
          %723 = vmatprep.subr.bf16.mxu0 0
          %724 = vmatpush1.bf16.xpose.msra.mxu0 0
          %725 = vmatprep.subr.bf16.mxu0 0
          %726 = vmatpush1.bf16.xpose.msra.mxu0 0
          %727 = vmatprep.subr.bf16.mxu0 0
          %728 = vmatpush1.bf16.xpose.msra.mxu0 0
          %729 = vmatprep.subr.bf16.mxu0 0
          %730 = vmatpush1.bf16.xpose.msra.mxu0 %v713
          %731 = vmatprep.subr.bf16.mxu0 0
          %732 = vmatpush2.bf16.xpose.msra.mxu0 0
          %733 = vmatprep.subr.bf16.mxu0 0
          %734 = vmatpush2.bf16.xpose.msra.mxu0 0
          %735 = vmatprep.subr.bf16.mxu0 0
          %736 = vmatpush2.bf16.xpose.msra.mxu0 0
          %737 = vmatprep.subr.bf16.mxu0 0
          %738 = vmatpush2.bf16.xpose.msra.mxu0 0
          %739 = vmatprep.subr.bf16.mxu0 0
          %740 = vmatpush2.bf16.xpose.msra.mxu0 0
          %741 = vmatprep.subr.bf16.mxu0 0
          %742 = vmatpush2.bf16.xpose.msra.mxu0 0
          %743 = vmatprep.subr.bf16.mxu0 0
          %744 = vmatpush2.bf16.xpose.msra.mxu0 0
          %745 = vmatprep.subr.bf16.mxu0 0
          %746 = vmatpush2.bf16.xpose.msra.mxu0 0
          %747 = vmatprep.mubr.bf16.mxu0 0
          %748 = vmatmul.mubr.bf16.gmra.mxu0 %v710
          %v749 = vpop.f32.mrf.mxu0
          %v750 = vadd.f32 0.0, %v749
          %v751 = vpop.f32.mrf.mxu0
          %v752 = vpop.f32.mrf.mxu0
          %v753 = vpop.f32.mrf.mxu0
          %754 = vdwg.mxu0
          %v755 = vmul.f32 %v612, 0.35355338
          %v756 = vmul.f32 %v658, 0.35355338
          %v757 = vmul.f32 %v704, 0.35355338
          %v758 = vmul.f32 %v750, 0.35355338
          %s759 = smul.u32 %s31, 8
          %v760 = vlaneseq
          %v761 = vshrl.u32 %v760, 7
          %v762 = vstv %s759
          %v763 = vadd.s32 %v762, %v761
          %s764 = smul.u32 %s32, 8
          %v765 = vlaneseq
          %v766 = vand.u32 %v765, 127
          %v767 = vstv %s764
          %v768 = vadd.s32 %v767, %v766
          %vm769 = vcmp.ge.s32.totalorder %v763, %v768
          %v770 = vsel %vm769, 1, 0
          %vm771 = vcmp.eq.s32.totalorder %v770, 1
          %v772 = vsel %vm771, %v755, -1e+30
          %v773 = vsel %vm771, %v756, -1e+30
          %v774 = vsel %vm771, %v757, -1e+30
          %v775 = vsel %vm771, %v758, -1e+30
          %v776 = vld [vmem:[#allocation2] sm:$0xff]
          %v777 = vld [vmem:[#allocation2 + $0x8] sm:$0xff]
          %v778 = vld [vmem:[#allocation2 + $0x10] sm:$0xff]
          %v779 = vld [vmem:[#allocation2 + $0x18] sm:$0xff]
          %v780 = vsel %vm570, %v772, -inf
          %781 = vmax.xlane.f32.xlu0 %v780
          %v782 = vpop.xlane.xlu0 %781
          %v783 = vsel %vm570, %v773, -inf
          %784 = vmax.xlane.f32.xlu0 %v783
          %v785 = vpop.xlane.xlu0 %784
          %v786 = vsel %vm570, %v774, -inf
          %787 = vmax.xlane.f32.xlu0 %v786
          %v788 = vpop.xlane.xlu0 %787
          %v789 = vsel %vm570, %v775, -inf
          %790 = vmax.xlane.f32.xlu0 %v789
          %v791 = vpop.xlane.xlu0 %790
          %v792 = vmax.f32 %v776, %v782
          %v793 = vmax.f32 %v777, %v785
          %v794 = vmax.f32 %v778, %v788
          %v795 = vmax.f32 %v779, %v791
          %v796 = vsub.f32 %v776, %v792
          %v797 = vsub.f32 %v777, %v793
          %v798 = vsub.f32 %v778, %v794
          %v799 = vsub.f32 %v779, %v795
          %v800 = vmul.f32 %v796, 1.442695
          %v801 = vpow.pop %v800
          %v802 = vmul.f32 %v797, 1.442695
          %v803 = vpow.pop %v802
          %v804 = vmul.f32 %v798, 1.442695
          %v805 = vpow.pop %v804
          %v806 = vmul.f32 %v799, 1.442695
          %v807 = vpow.pop %v806
          %809 = vset.pattern.permute.xlu0 0
          %810 = vperm.xlu0 %809, %v792
          %v811 = vpop.permute.xlu0 %810
          %814 = vset.pattern.permute.xlu0 0
          %815 = vperm.xlu0 %814, %v793
          %v816 = vpop.permute.xlu0 %815
          %819 = vset.pattern.permute.xlu0 0
          %820 = vperm.xlu0 %819, %v794
          %v821 = vpop.permute.xlu0 %820
          %824 = vset.pattern.permute.xlu0 0
          %825 = vperm.xlu0 %824, %v795
          %v826 = vpop.permute.xlu0 %825
          %v828 = vsub.f32 %v772, %v811
          %v829 = vsub.f32 %v773, %v816
          %v830 = vsub.f32 %v774, %v821
          %v831 = vsub.f32 %v775, %v826
          %v832 = vmul.f32 %v828, 1.442695
          %v833 = vpow.pop %v832
          %v834 = vmul.f32 %v829, 1.442695
          %v835 = vpow.pop %v834
          %v836 = vmul.f32 %v830, 1.442695
          %v837 = vpow.pop %v836
          %v838 = vmul.f32 %v831, 1.442695
          %v839 = vpow.pop %v838
          %v840 = vld [vmem:[#allocation3] sm:$0xff]
          %v841 = vld [vmem:[#allocation3 + $0x8] sm:$0xff]
          %v842 = vld [vmem:[#allocation3 + $0x10] sm:$0xff]
          %v843 = vld [vmem:[#allocation3 + $0x18] sm:$0xff]
          %v844 = vmul.f32 %v801, %v840
          %v845 = vmul.f32 %v803, %v841
          %v846 = vmul.f32 %v805, %v842
          %v847 = vmul.f32 %v807, %v843
          %v848 = vsel %vm570, %v833, 0.0
          %849 = vadd.xlane.f32.xlu0 %v848
          %v850 = vpop.xlane.xlu0 %849
          %v851 = vsel %vm570, %v835, 0.0
          %852 = vadd.xlane.f32.xlu0 %v851
          %v853 = vpop.xlane.xlu0 %852
          %v854 = vsel %vm570, %v837, 0.0
          %855 = vadd.xlane.f32.xlu0 %v854
          %v856 = vpop.xlane.xlu0 %855
          %v857 = vsel %vm570, %v839, 0.0
          %858 = vadd.xlane.f32.xlu0 %v857
          %v859 = vpop.xlane.xlu0 %858
          %v860 = vadd.f32 %v844, %v850
          %v861 = vadd.f32 %v845, %v853
          %v862 = vadd.f32 %v846, %v856
          %v863 = vadd.f32 %v847, %v859
          %vm864 = vcmask 7168
          %865 = vst.msk [vmem:[#allocation3] sm:$0xff] %vm864, %v860
          %866 = vst.msk [vmem:[#allocation3 + $0x8] sm:$0xff] %vm864, %v861
          %867 = vst.msk [vmem:[#allocation3 + $0x10] sm:$0xff] %vm864, %v862
          %868 = vst.msk [vmem:[#allocation3 + $0x18] sm:$0xff] %vm864, %v863
          %v869 = vld [vmem:[#allocation4] sm:$0xff]
          %v870 = vld [vmem:[#allocation4 + $0x8] sm:$0xff]
          %v871 = vld [vmem:[#allocation4 + $0x10] sm:$0xff]
          %v872 = vld [vmem:[#allocation4 + $0x18] sm:$0xff]
          %874 = vset.pattern.permute.xlu0 0
          %875 = vperm.xlu0 %874, %v801
          %v876 = vpop.permute.xlu0 %875
          %879 = vset.pattern.permute.xlu0 0
          %880 = vperm.xlu0 %879, %v803
          %v881 = vpop.permute.xlu0 %880
          %884 = vset.pattern.permute.xlu0 0
          %885 = vperm.xlu0 %884, %v805
          %v886 = vpop.permute.xlu0 %885
          %889 = vset.pattern.permute.xlu0 0
          %890 = vperm.xlu0 %889, %v807
          %v891 = vpop.permute.xlu0 %890
          %v893 = vmul.f32 %v876, %v869
          %v894 = vmul.f32 %v881, %v870
          %v895 = vmul.f32 %v886, %v871
          %v896 = vmul.f32 %v891, %v872
          %v897 = vpack.c.bf16 %v833, %v833
          %v898 = vpack.c.bf16 %v835, %v835
          %v899 = vpack.c.bf16 %v837, %v837
          %v900 = vpack.c.bf16 %v839, %v839
          %v902 = vsel %vm570, %v897, 0
          %vm904 = vcmask 1043456
          %v906 = vsel %vm904, %v566, 0
          %908 = vmatprep.subr.bf16.mxu0 0
          %909 = vmatpush1.bf16.msra.mxu0 0
          %910 = vmatprep.subr.bf16.mxu0 0
          %911 = vmatpush1.bf16.msra.mxu0 0
          %912 = vmatprep.subr.bf16.mxu0 0
          %913 = vmatpush1.bf16.msra.mxu0 0
          %914 = vmatprep.subr.bf16.mxu0 0
          %915 = vmatpush1.bf16.msra.mxu0 0
          %916 = vmatprep.subr.bf16.mxu0 0
          %917 = vmatpush1.bf16.msra.mxu0 0
          %918 = vmatprep.subr.bf16.mxu0 0
          %919 = vmatpush1.bf16.msra.mxu0 0
          %920 = vmatprep.subr.bf16.mxu0 0
          %921 = vmatpush1.bf16.msra.mxu0 0
          %922 = vmatprep.subr.bf16.mxu0 0
          %923 = vmatpush1.bf16.msra.mxu0 %v906
          %924 = vmatprep.subr.bf16.mxu0 0
          %925 = vmatpush2.bf16.msra.mxu0 0
          %926 = vmatprep.subr.bf16.mxu0 0
          %927 = vmatpush2.bf16.msra.mxu0 0
          %928 = vmatprep.subr.bf16.mxu0 0
          %929 = vmatpush2.bf16.msra.mxu0 0
          %930 = vmatprep.subr.bf16.mxu0 0
          %931 = vmatpush2.bf16.msra.mxu0 0
          %932 = vmatprep.subr.bf16.mxu0 0
          %933 = vmatpush2.bf16.msra.mxu0 0
          %934 = vmatprep.subr.bf16.mxu0 0
          %935 = vmatpush2.bf16.msra.mxu0 0
          %936 = vmatprep.subr.bf16.mxu0 0
          %937 = vmatpush2.bf16.msra.mxu0 0
          %938 = vmatprep.subr.bf16.mxu0 0
          %939 = vmatpush2.bf16.msra.mxu0 0
          %940 = vmatprep.mubr.bf16.mxu0 0
          %941 = vmatmul.mubr.bf16.gmra.mxu0 %v902
          %v942 = vpop.f32.mrf.mxu0
          %v943 = vadd.f32 0.0, %v942
          %v944 = vpop.f32.mrf.mxu0
          %v945 = vpop.f32.mrf.mxu0
          %v946 = vpop.f32.mrf.mxu0
          %947 = vdwg.mxu0
          %v949 = vsel %vm570, %v898, 0
          %v952 = vsel %vm904, %v567, 0
          %954 = vmatprep.subr.bf16.mxu0 0
          %955 = vmatpush1.bf16.msra.mxu0 0
          %956 = vmatprep.subr.bf16.mxu0 0
          %957 = vmatpush1.bf16.msra.mxu0 0
          %958 = vmatprep.subr.bf16.mxu0 0
          %959 = vmatpush1.bf16.msra.mxu0 0
          %960 = vmatprep.subr.bf16.mxu0 0
          %961 = vmatpush1.bf16.msra.mxu0 0
          %962 = vmatprep.subr.bf16.mxu0 0
          %963 = vmatpush1.bf16.msra.mxu0 0
          %964 = vmatprep.subr.bf16.mxu0 0
          %965 = vmatpush1.bf16.msra.mxu0 0
          %966 = vmatprep.subr.bf16.mxu0 0
          %967 = vmatpush1.bf16.msra.mxu0 0
          %968 = vmatprep.subr.bf16.mxu0 0
          %969 = vmatpush1.bf16.msra.mxu0 %v952
          %970 = vmatprep.subr.bf16.mxu0 0
          %971 = vmatpush2.bf16.msra.mxu0 0
          %972 = vmatprep.subr.bf16.mxu0 0
          %973 = vmatpush2.bf16.msra.mxu0 0
          %974 = vmatprep.subr.bf16.mxu0 0
          %975 = vmatpush2.bf16.msra.mxu0 0
          %976 = vmatprep.subr.bf16.mxu0 0
          %977 = vmatpush2.bf16.msra.mxu0 0
          %978 = vmatprep.subr.bf16.mxu0 0
          %979 = vmatpush2.bf16.msra.mxu0 0
          %980 = vmatprep.subr.bf16.mxu0 0
          %981 = vmatpush2.bf16.msra.mxu0 0
          %982 = vmatprep.subr.bf16.mxu0 0
          %983 = vmatpush2.bf16.msra.mxu0 0
          %984 = vmatprep.subr.bf16.mxu0 0
          %985 = vmatpush2.bf16.msra.mxu0 0
          %986 = vmatprep.mubr.bf16.mxu0 0
          %987 = vmatmul.mubr.bf16.gmra.mxu0 %v949
          %v988 = vpop.f32.mrf.mxu0
          %v989 = vadd.f32 0.0, %v988
          %v990 = vpop.f32.mrf.mxu0
          %v991 = vpop.f32.mrf.mxu0
          %v992 = vpop.f32.mrf.mxu0
          %993 = vdwg.mxu0
          %v995 = vsel %vm570, %v899, 0
          %v998 = vsel %vm904, %v568, 0
          %1000 = vmatprep.subr.bf16.mxu0 0
          %1001 = vmatpush1.bf16.msra.mxu0 0
          %1002 = vmatprep.subr.bf16.mxu0 0
          %1003 = vmatpush1.bf16.msra.mxu0 0
          %1004 = vmatprep.subr.bf16.mxu0 0
          %1005 = vmatpush1.bf16.msra.mxu0 0
          %1006 = vmatprep.subr.bf16.mxu0 0
          %1007 = vmatpush1.bf16.msra.mxu0 0
          %1008 = vmatprep.subr.bf16.mxu0 0
          %1009 = vmatpush1.bf16.msra.mxu0 0
          %1010 = vmatprep.subr.bf16.mxu0 0
          %1011 = vmatpush1.bf16.msra.mxu0 0
          %1012 = vmatprep.subr.bf16.mxu0 0
          %1013 = vmatpush1.bf16.msra.mxu0 0
          %1014 = vmatprep.subr.bf16.mxu0 0
          %1015 = vmatpush1.bf16.msra.mxu0 %v998
          %1016 = vmatprep.subr.bf16.mxu0 0
          %1017 = vmatpush2.bf16.msra.mxu0 0
          %1018 = vmatprep.subr.bf16.mxu0 0
          %1019 = vmatpush2.bf16.msra.mxu0 0
          %1020 = vmatprep.subr.bf16.mxu0 0
          %1021 = vmatpush2.bf16.msra.mxu0 0
          %1022 = vmatprep.subr.bf16.mxu0 0
          %1023 = vmatpush2.bf16.msra.mxu0 0
          %1024 = vmatprep.subr.bf16.mxu0 0
          %1025 = vmatpush2.bf16.msra.mxu0 0
          %1026 = vmatprep.subr.bf16.mxu0 0
          %1027 = vmatpush2.bf16.msra.mxu0 0
          %1028 = vmatprep.subr.bf16.mxu0 0
          %1029 = vmatpush2.bf16.msra.mxu0 0
          %1030 = vmatprep.subr.bf16.mxu0 0
          %1031 = vmatpush2.bf16.msra.mxu0 0
          %1032 = vmatprep.mubr.bf16.mxu0 0
          %1033 = vmatmul.mubr.bf16.gmra.mxu0 %v995
          %v1034 = vpop.f32.mrf.mxu0
          %v1035 = vadd.f32 0.0, %v1034
          %v1036 = vpop.f32.mrf.mxu0
          %v1037 = vpop.f32.mrf.mxu0
          %v1038 = vpop.f32.mrf.mxu0
          %1039 = vdwg.mxu0
          %v1041 = vsel %vm570, %v900, 0
          %v1044 = vsel %vm904, %v569, 0
          %1046 = vmatprep.subr.bf16.mxu0 0
          %1047 = vmatpush1.bf16.msra.mxu0 0
          %1048 = vmatprep.subr.bf16.mxu0 0
          %1049 = vmatpush1.bf16.msra.mxu0 0
          %1050 = vmatprep.subr.bf16.mxu0 0
          %1051 = vmatpush1.bf16.msra.mxu0 0
          %1052 = vmatprep.subr.bf16.mxu0 0
          %1053 = vmatpush1.bf16.msra.mxu0 0
          %1054 = vmatprep.subr.bf16.mxu0 0
          %1055 = vmatpush1.bf16.msra.mxu0 0
          %1056 = vmatprep.subr.bf16.mxu0 0
          %1057 = vmatpush1.bf16.msra.mxu0 0
          %1058 = vmatprep.subr.bf16.mxu0 0
          %1059 = vmatpush1.bf16.msra.mxu0 0
          %1060 = vmatprep.subr.bf16.mxu0 0
          %1061 = vmatpush1.bf16.msra.mxu0 %v1044
          %1062 = vmatprep.subr.bf16.mxu0 0
          %1063 = vmatpush2.bf16.msra.mxu0 0
          %1064 = vmatprep.subr.bf16.mxu0 0
          %1065 = vmatpush2.bf16.msra.mxu0 0
          %1066 = vmatprep.subr.bf16.mxu0 0
          %1067 = vmatpush2.bf16.msra.mxu0 0
          %1068 = vmatprep.subr.bf16.mxu0 0
          %1069 = vmatpush2.bf16.msra.mxu0 0
          %1070 = vmatprep.subr.bf16.mxu0 0
          %1071 = vmatpush2.bf16.msra.mxu0 0
          %1072 = vmatprep.subr.bf16.mxu0 0
          %1073 = vmatpush2.bf16.msra.mxu0 0
          %1074 = vmatprep.subr.bf16.mxu0 0
          %1075 = vmatpush2.bf16.msra.mxu0 0
          %1076 = vmatprep.subr.bf16.mxu0 0
          %1077 = vmatpush2.bf16.msra.mxu0 0
          %1078 = vmatprep.mubr.bf16.mxu0 0
          %1079 = vmatmul.mubr.bf16.gmra.mxu0 %v1041
          %v1080 = vpop.f32.mrf.mxu0
          %v1081 = vadd.f32 0.0, %v1080
          %v1082 = vpop.f32.mrf.mxu0
          %v1083 = vpop.f32.mrf.mxu0
          %v1084 = vpop.f32.mrf.mxu0
          %1085 = vdwg.mxu0
          %v1086 = vadd.f32 %v893, %v943
          %v1087 = vadd.f32 %v894, %v989
          %v1088 = vadd.f32 %v895, %v1035
          %v1089 = vadd.f32 %v896, %v1081
          %1090 = vst.msk [vmem:[#allocation4] sm:$0xff] %vm570, %v1086
          %1091 = vst.msk [vmem:[#allocation4 + $0x8] sm:$0xff] %vm570, %v1087
          %1092 = vst.msk [vmem:[#allocation4 + $0x10] sm:$0xff] %vm570, %v1088
          %1093 = vst.msk [vmem:[#allocation4 + $0x18] sm:$0xff] %vm570, %v1089
          %1094 = vst.msk [vmem:[#allocation2] sm:$0xff] %vm864, %v792
          %1095 = vst.msk [vmem:[#allocation2 + $0x8] sm:$0xff] %vm864, %v793
          %1096 = vst.msk [vmem:[#allocation2 + $0x10] sm:$0xff] %vm864, %v794
          %1097 = vst.msk [vmem:[#allocation2 + $0x18] sm:$0xff] %vm864, %v795
        $region72: #{_nanogpt_block_impl.3} parent=63 // pred_fallthru
          _
        %p1098 = scmp.eq.s32.totalorder %s32, %s31
        // Predicated region
        $region73: #{_nanogpt_block_impl.3} parent=63 // pred_check
          %p1099 = pneg %p1098
        $region74: #{_nanogpt_block_impl.3} parent=63 // pred_check_branch
          %1101 = sbr.rel (%p1099) target = $region76
        $region75: #{_nanogpt_block_impl.3} parent=63 // pred_region
          %v1102 = vld [vmem:[%s502] sm:$0xff]
          %v1103 = vld [vmem:[#allocation4] sm:$0xff]
          %v1104 = vld [vmem:[#allocation4 + $0x8] sm:$0xff]
          %v1105 = vld [vmem:[#allocation4 + $0x10] sm:$0xff]
          %v1106 = vld [vmem:[#allocation4 + $0x18] sm:$0xff]
          %v1107 = vld [vmem:[#allocation3] sm:$0xff]
          %v1108 = vld [vmem:[#allocation3 + $0x8] sm:$0xff]
          %v1109 = vld [vmem:[#allocation3 + $0x10] sm:$0xff]
          %v1110 = vld [vmem:[#allocation3 + $0x18] sm:$0xff]
          %v1111 = vrcp.pop %v1107
          %v1112 = vrcp.pop %v1108
          %v1113 = vrcp.pop %v1109
          %v1114 = vrcp.pop %v1110
          %1116 = vset.pattern.permute.xlu0 0
          %1117 = vperm.xlu0 %1116, %v1111
          %v1118 = vpop.permute.xlu0 %1117
          %1121 = vset.pattern.permute.xlu0 0
          %1122 = vperm.xlu0 %1121, %v1112
          %v1123 = vpop.permute.xlu0 %1122
          %1126 = vset.pattern.permute.xlu0 0
          %1127 = vperm.xlu0 %1126, %v1113
          %v1128 = vpop.permute.xlu0 %1127
          %1131 = vset.pattern.permute.xlu0 0
          %1132 = vperm.xlu0 %1131, %v1114
          %v1133 = vpop.permute.xlu0 %1132
          %v1135 = vmul.f32 %v1103, %v1118
          %v1136 = vmul.f32 %v1104, %v1123
          %v1137 = vmul.f32 %v1105, %v1128
          %v1138 = vmul.f32 %v1106, %v1133
          %v1139 = vpack.c.bf16 %v1135, %v1135
          %v1140 = vpack.c.bf16 %v1136, %v1136
          %v1141 = vpack.c.bf16 %v1137, %v1137
          %v1142 = vpack.c.bf16 %v1138, %v1138
          %v1143 = vld [vmem:[%s4] sm:$0xf]
          %s1144 = scalar_lea.vmem %s4, 4
          %v1145 = vld [vmem:[%s1144] sm:$0xf]
          %vm1146 = vcmask 64512
          %v1148 = vsel %vm1146, %v1140, 0
          %vm1150 = vcmask 1043456
          %v1152 = vsel %vm1150, %v1145, 0
          %1154 = vmatprep.subr.bf16.mxu0 0
          %1155 = vmatpush1.bf16.msra.mxu0 0
          %1156 = vmatprep.subr.bf16.mxu0 0
          %1157 = vmatpush1.bf16.msra.mxu0 0
          %1158 = vmatprep.subr.bf16.mxu0 0
          %1159 = vmatpush1.bf16.msra.mxu0 0
          %1160 = vmatprep.subr.bf16.mxu0 0
          %1161 = vmatpush1.bf16.msra.mxu0 0
          %1162 = vmatprep.subr.bf16.mxu0 0
          %1163 = vmatpush1.bf16.msra.mxu0 0
          %1164 = vmatprep.subr.bf16.mxu0 0
          %1165 = vmatpush1.bf16.msra.mxu0 0
          %1166 = vmatprep.subr.bf16.mxu0 0
          %1167 = vmatpush1.bf16.msra.mxu0 0
          %1168 = vmatprep.subr.bf16.mxu0 0
          %1169 = vmatpush1.bf16.msra.mxu0 %v1152
          %1170 = vmatprep.subr.bf16.mxu0 0
          %1171 = vmatpush2.bf16.msra.mxu0 0
          %1172 = vmatprep.subr.bf16.mxu0 0
          %1173 = vmatpush2.bf16.msra.mxu0 0
          %1174 = vmatprep.subr.bf16.mxu0 0
          %1175 = vmatpush2.bf16.msra.mxu0 0
          %1176 = vmatprep.subr.bf16.mxu0 0
          %1177 = vmatpush2.bf16.msra.mxu0 0
          %1178 = vmatprep.subr.bf16.mxu0 0
          %1179 = vmatpush2.bf16.msra.mxu0 0
          %1180 = vmatprep.subr.bf16.mxu0 0
          %1181 = vmatpush2.bf16.msra.mxu0 0
          %1182 = vmatprep.subr.bf16.mxu0 0
          %1183 = vmatpush2.bf16.msra.mxu0 0
          %1184 = vmatprep.subr.bf16.mxu0 0
          %1185 = vmatpush2.bf16.msra.mxu0 0
          %1186 = vmatprep.mubr.bf16.mxu0 0
          %1187 = vmatmul.mubr.bf16.gmra.mxu0 %v1148
          %v1188 = vpop.f32.mrf.mxu0
          %v1189 = vadd.f32 0.0, %v1188
          %v1190 = vpop.f32.mrf.mxu0
          %v1191 = vpop.f32.mrf.mxu0
          %v1192 = vpop.f32.mrf.mxu0
          %1193 = vdwg.mxu0
          %v1195 = vsel %vm1146, %v1139, 0
          %v1198 = vsel %vm1150, %v1143, 0
          %1200 = vmatprep.subr.bf16.mxu0 0
          %1201 = vmatpush1.bf16.msra.mxu0 0
          %1202 = vmatprep.subr.bf16.mxu0 0
          %1203 = vmatpush1.bf16.msra.mxu0 0
          %1204 = vmatprep.subr.bf16.mxu0 0
          %1205 = vmatpush1.bf16.msra.mxu0 0
          %1206 = vmatprep.subr.bf16.mxu0 0
          %1207 = vmatpush1.bf16.msra.mxu0 0
          %1208 = vmatprep.subr.bf16.mxu0 0
          %1209 = vmatpush1.bf16.msra.mxu0 0
          %1210 = vmatprep.subr.bf16.mxu0 0
          %1211 = vmatpush1.bf16.msra.mxu0 0
          %1212 = vmatprep.subr.bf16.mxu0 0
          %1213 = vmatpush1.bf16.msra.mxu0 0
          %1214 = vmatprep.subr.bf16.mxu0 0
          %1215 = vmatpush1.bf16.msra.mxu0 %v1198
          %1216 = vmatprep.subr.bf16.mxu0 0
          %1217 = vmatpush2.bf16.msra.mxu0 0
          %1218 = vmatprep.subr.bf16.mxu0 0
          %1219 = vmatpush2.bf16.msra.mxu0 0
          %1220 = vmatprep.subr.bf16.mxu0 0
          %1221 = vmatpush2.bf16.msra.mxu0 0
          %1222 = vmatprep.subr.bf16.mxu0 0
          %1223 = vmatpush2.bf16.msra.mxu0 0
          %1224 = vmatprep.subr.bf16.mxu0 0
          %1225 = vmatpush2.bf16.msra.mxu0 0
          %1226 = vmatprep.subr.bf16.mxu0 0
          %1227 = vmatpush2.bf16.msra.mxu0 0
          %1228 = vmatprep.subr.bf16.mxu0 0
          %1229 = vmatpush2.bf16.msra.mxu0 0
          %1230 = vmatprep.subr.bf16.mxu0 0
          %1231 = vmatpush2.bf16.msra.mxu0 0
          %1232 = vmatprep.mubr.bf16.mxu0 0
          %1233 = vmatmul.mubr.bf16.gmra.mxu0 %v1195
          %v1234 = vpop.f32.mrf.mxu0
          %v1235 = vadd.f32 %v1189, %v1234
          %v1236 = vpop.f32.mrf.mxu0
          %v1237 = vpop.f32.mrf.mxu0
          %v1238 = vpop.f32.mrf.mxu0
          %1239 = vdwg.mxu0
          %s1240 = scalar_lea.vmem %s4, 8
          %v1241 = vld [vmem:[%s1240] sm:$0xf]
          %v1243 = vsel %vm1146, %v1141, 0
          %v1246 = vsel %vm1150, %v1241, 0
          %1248 = vmatprep.subr.bf16.mxu0 0
          %1249 = vmatpush1.bf16.msra.mxu0 0
          %1250 = vmatprep.subr.bf16.mxu0 0
          %1251 = vmatpush1.bf16.msra.mxu0 0
          %1252 = vmatprep.subr.bf16.mxu0 0
          %1253 = vmatpush1.bf16.msra.mxu0 0
          %1254 = vmatprep.subr.bf16.mxu0 0
          %1255 = vmatpush1.bf16.msra.mxu0 0
          %1256 = vmatprep.subr.bf16.mxu0 0
          %1257 = vmatpush1.bf16.msra.mxu0 0
          %1258 = vmatprep.subr.bf16.mxu0 0
          %1259 = vmatpush1.bf16.msra.mxu0 0
          %1260 = vmatprep.subr.bf16.mxu0 0
          %1261 = vmatpush1.bf16.msra.mxu0 0
          %1262 = vmatprep.subr.bf16.mxu0 0
          %1263 = vmatpush1.bf16.msra.mxu0 %v1246
          %1264 = vmatprep.subr.bf16.mxu0 0
          %1265 = vmatpush2.bf16.msra.mxu0 0
          %1266 = vmatprep.subr.bf16.mxu0 0
          %1267 = vmatpush2.bf16.msra.mxu0 0
          %1268 = vmatprep.subr.bf16.mxu0 0
          %1269 = vmatpush2.bf16.msra.mxu0 0
          %1270 = vmatprep.subr.bf16.mxu0 0
          %1271 = vmatpush2.bf16.msra.mxu0 0
          %1272 = vmatprep.subr.bf16.mxu0 0
          %1273 = vmatpush2.bf16.msra.mxu0 0
          %1274 = vmatprep.subr.bf16.mxu0 0
          %1275 = vmatpush2.bf16.msra.mxu0 0
          %1276 = vmatprep.subr.bf16.mxu0 0
          %1277 = vmatpush2.bf16.msra.mxu0 0
          %1278 = vmatprep.subr.bf16.mxu0 0
          %1279 = vmatpush2.bf16.msra.mxu0 0
          %1280 = vmatprep.mubr.bf16.mxu0 0
          %1281 = vmatmul.mubr.bf16.gmra.mxu0 %v1243
          %v1282 = vpop.f32.mrf.mxu0
          %v1283 = vadd.f32 0.0, %v1282
          %v1284 = vpop.f32.mrf.mxu0
          %v1285 = vpop.f32.mrf.mxu0
          %v1286 = vpop.f32.mrf.mxu0
          %1287 = vdwg.mxu0
          %v1288 = vadd.f32 %v1235, %v1283
          %s1289 = scalar_lea.vmem %s4, 12
          %v1290 = vld [vmem:[%s1289] sm:$0xf]
          %v1292 = vsel %vm1146, %v1142, 0
          %v1295 = vsel %vm1150, %v1290, 0
          %1297 = vmatprep.subr.bf16.mxu0 0
          %1298 = vmatpush1.bf16.msra.mxu0 0
          %1299 = vmatprep.subr.bf16.mxu0 0
          %1300 = vmatpush1.bf16.msra.mxu0 0
          %1301 = vmatprep.subr.bf16.mxu0 0
          %1302 = vmatpush1.bf16.msra.mxu0 0
          %1303 = vmatprep.subr.bf16.mxu0 0
          %1304 = vmatpush1.bf16.msra.mxu0 0
          %1305 = vmatprep.subr.bf16.mxu0 0
          %1306 = vmatpush1.bf16.msra.mxu0 0
          %1307 = vmatprep.subr.bf16.mxu0 0
          %1308 = vmatpush1.bf16.msra.mxu0 0
          %1309 = vmatprep.subr.bf16.mxu0 0
          %1310 = vmatpush1.bf16.msra.mxu0 0
          %1311 = vmatprep.subr.bf16.mxu0 0
          %1312 = vmatpush1.bf16.msra.mxu0 %v1295
          %1313 = vmatprep.subr.bf16.mxu0 0
          %1314 = vmatpush2.bf16.msra.mxu0 0
          %1315 = vmatprep.subr.bf16.mxu0 0
          %1316 = vmatpush2.bf16.msra.mxu0 0
          %1317 = vmatprep.subr.bf16.mxu0 0
          %1318 = vmatpush2.bf16.msra.mxu0 0
          %1319 = vmatprep.subr.bf16.mxu0 0
          %1320 = vmatpush2.bf16.msra.mxu0 0
          %1321 = vmatprep.subr.bf16.mxu0 0
          %1322 = vmatpush2.bf16.msra.mxu0 0
          %1323 = vmatprep.subr.bf16.mxu0 0
          %1324 = vmatpush2.bf16.msra.mxu0 0
          %1325 = vmatprep.subr.bf16.mxu0 0
          %1326 = vmatpush2.bf16.msra.mxu0 0
          %1327 = vmatprep.subr.bf16.mxu0 0
          %1328 = vmatpush2.bf16.msra.mxu0 0
          %1329 = vmatprep.mubr.bf16.mxu0 0
          %1330 = vmatmul.mubr.bf16.gmra.mxu0 %v1292
          %v1331 = vpop.f32.mrf.mxu0
          %v1332 = vadd.f32 0.0, %v1331
          %v1333 = vpop.f32.mrf.mxu0
          %v1334 = vpop.f32.mrf.mxu0
          %v1335 = vpop.f32.mrf.mxu0
          %1336 = vdwg.mxu0
          %v1337 = vadd.f32 %v1288, %v1332
          %v1338 = vadd.f32 %v1102, %v1337
          %v1339 = vld [vmem:[%s5] sm:$0x1]
          %v1340 = vld [vmem:[%s6] sm:$0x1]
          %vm1341 = vcmask 261120
          %v1342 = vsel %vm1341, %v1338, 0.0
          %1343 = vadd.xlane.f32.xlu0 %v1342
          %v1344 = vpop.xlane.xlu0 %1343
          %v1345 = vrcp.pop 32.0
          %v1346 = vmul.f32 %v1344, %v1345
          %v1347 = vsub.f32 %v1338, %v1346
          %v1348 = vmul.f32 %v1347, %v1347
          %v1349 = vsel %vm1341, %v1348, 0.0
          %1350 = vadd.xlane.f32.xlu0 %v1349
          %v1351 = vpop.xlane.xlu0 %1350
          %v1352 = vmul.f32 %v1351, 0.032258064
          %v1353 = vadd.f32 %v1352, 1e-05
          %v1354 = vrsqrt.pop %v1353
          %v1355 = vmul.f32 %v1347, %v1354
          %v1357 = vlaneseq
          %v1358 = vshrl.u32 %v1357, 7
          %v1359 = vsub.s32 0, %v1358
          %v1360 = vrot.slane %v1339, %v1359
          %v1362 = vmul.f32 %v1355, %v1360
          %v1364 = vlaneseq
          %v1365 = vshrl.u32 %v1364, 7
          %v1366 = vsub.s32 0, %v1365
          %v1367 = vrot.slane %v1340, %v1366
          %v1369 = vadd.f32 %v1362, %v1367
          %v1370 = vpack.c.bf16 %v1369, %v1369
          %v1371 = vld [vmem:[%s7] sm:$0xf]
          %v1372 = vld [vmem:[%s7 + $0x4] sm:$0xf]
          %v1373 = vld [vmem:[%s7 + $0x8] sm:$0xf]
          %v1374 = vld [vmem:[%s7 + $0xc] sm:$0xf]
          %v1375 = vld [vmem:[%s8] sm:$0x1]
          %v1377 = vlaneseq
          %v1378 = vshrl.u32 %v1377, 7
          %v1379 = vsub.s32 0, %v1378
          %v1380 = vrot.slane %v1375, %v1379
          %v1386 = vunpack.c.l.b16 %v1371
          %v1387 = vunpack.c.l.b16 %v1372
          %v1388 = vunpack.c.l.b16 %v1373
          %v1389 = vunpack.c.l.b16 %v1374
          %v1390 = vpack.c.b16 %v1387, %v1386
          %v1391 = vpack.c.b16 %v1389, %v1388
          %v1395 = vsel %vm1341, %v1370, 0
          %1397 = vmatprep.subr.bf16.mxu0 0
          %1398 = vmatpush1.bf16.msra.mxu0 0
          %1399 = vmatprep.subr.bf16.mxu0 0
          %1400 = vmatpush1.bf16.msra.mxu0 0
          %1401 = vmatprep.subr.bf16.mxu0 0
          %1402 = vmatpush1.bf16.msra.mxu0 0
          %1403 = vmatprep.subr.bf16.mxu0 0
          %1404 = vmatpush1.bf16.msra.mxu0 0
          %1405 = vmatprep.subr.bf16.mxu0 0
          %1406 = vmatpush1.bf16.msra.mxu0 0
          %1407 = vmatprep.subr.bf16.mxu0 0
          %1408 = vmatpush1.bf16.msra.mxu0 0
          %1409 = vmatprep.subr.bf16.mxu0 0
          %1410 = vmatpush1.bf16.msra.mxu0 %v1391
          %1411 = vmatprep.subr.bf16.mxu0 0
          %1412 = vmatpush1.bf16.msra.mxu0 %v1390
          %1413 = vmatprep.subr.bf16.mxu0 0
          %1414 = vmatpush2.bf16.msra.mxu0 0
          %1415 = vmatprep.subr.bf16.mxu0 0
          %1416 = vmatpush2.bf16.msra.mxu0 0
          %1417 = vmatprep.subr.bf16.mxu0 0
          %1418 = vmatpush2.bf16.msra.mxu0 0
          %1419 = vmatprep.subr.bf16.mxu0 0
          %1420 = vmatpush2.bf16.msra.mxu0 0
          %1421 = vmatprep.subr.bf16.mxu0 0
          %1422 = vmatpush2.bf16.msra.mxu0 0
          %1423 = vmatprep.subr.bf16.mxu0 0
          %1424 = vmatpush2.bf16.msra.mxu0 0
          %1425 = vmatprep.subr.bf16.mxu0 0
          %1426 = vmatpush2.bf16.msra.mxu0 0
          %1427 = vmatprep.subr.bf16.mxu0 0
          %1428 = vmatpush2.bf16.msra.mxu0 0
          %1429 = vmatprep.mubr.bf16.mxu0 0
          %1430 = vmatmul.mubr.bf16.gmra.mxu0 %v1395
          %v1431 = vpop.f32.mrf.mxu0
          %v1432 = vadd.f32 %v1380, %v1431
          %v1433 = vpop.f32.mrf.mxu0
          %v1434 = vpop.f32.mrf.mxu0
          %v1435 = vpop.f32.mrf.mxu0
          %1436 = vdwg.mxu0
          %v1437 = vmul.f32 %v1432, 1.702
          %v1438 = vxor.u32 %v1437, 2147483648
          %v1439 = vmul.f32 %v1438, 1.442695
          %v1440 = vpow.pop %v1439
          %v1441 = vadd.f32 %v1440, 1.0
          %v1442 = vrcp.pop %v1441
          %v1443 = vmul.f32 1.0, %v1442
          %v1444 = vmul.f32 %v1432, %v1443
          %v1445 = vpack.c.bf16 %v1444, %v1444
          %v1446 = vld [vmem:[%s9] sm:$0xf]
          %v1447 = vld [vmem:[%s9 + $0x4] sm:$0xf]
          %v1448 = vld [vmem:[%s9 + $0x8] sm:$0xf]
          %v1449 = vld [vmem:[%s9 + $0xc] sm:$0xf]
          %v1450 = vld [vmem:[%s9 + $0x10] sm:$0xf]
          %v1451 = vld [vmem:[%s9 + $0x14] sm:$0xf]
          %v1452 = vld [vmem:[%s9 + $0x18] sm:$0xf]
          %v1453 = vld [vmem:[%s9 + $0x1c] sm:$0xf]
          %v1454 = vld [vmem:[%s9 + $0x20] sm:$0xf]
          %v1455 = vld [vmem:[%s9 + $0x24] sm:$0xf]
          %v1456 = vld [vmem:[%s9 + $0x28] sm:$0xf]
          %v1457 = vld [vmem:[%s9 + $0x2c] sm:$0xf]
          %v1458 = vld [vmem:[%s9 + $0x30] sm:$0xf]
          %v1459 = vld [vmem:[%s9 + $0x34] sm:$0xf]
          %v1460 = vld [vmem:[%s9 + $0x38] sm:$0xf]
          %v1461 = vld [vmem:[%s9 + $0x3c] sm:$0xf]
          %v1462 = vld [vmem:[%s10] sm:$0x1]
          %v1464 = vlaneseq
          %v1465 = vshrl.u32 %v1464, 7
          %v1466 = vsub.s32 0, %v1465
          %v1467 = vrot.slane %v1462, %v1466
          %v1485 = vunpack.c.l.b16 %v1446
          %v1486 = vunpack.c.l.b16 %v1447
          %v1487 = vunpack.c.l.b16 %v1448
          %v1488 = vunpack.c.l.b16 %v1449
          %v1489 = vunpack.c.l.b16 %v1450
          %v1490 = vunpack.c.l.b16 %v1451
          %v1491 = vunpack.c.l.b16 %v1452
          %v1492 = vunpack.c.l.b16 %v1453
          %v1493 = vunpack.c.l.b16 %v1454
          %v1494 = vunpack.c.l.b16 %v1455
          %v1495 = vunpack.c.l.b16 %v1456
          %v1496 = vunpack.c.l.b16 %v1457
          %v1497 = vunpack.c.l.b16 %v1458
          %v1498 = vunpack.c.l.b16 %v1459
          %v1499 = vunpack.c.l.b16 %v1460
          %v1500 = vunpack.c.l.b16 %v1461
          %v1501 = vpack.c.b16 %v1486, %v1485
          %v1502 = vpack.c.b16 %v1488, %v1487
          %v1503 = vpack.c.b16 %v1490, %v1489
          %v1504 = vpack.c.b16 %v1492, %v1491
          %v1505 = vpack.c.b16 %v1494, %v1493
          %v1506 = vpack.c.b16 %v1496, %v1495
          %v1507 = vpack.c.b16 %v1498, %v1497
          %v1508 = vpack.c.b16 %v1500, %v1499
          %1517 = vmatprep.subr.bf16.mxu0 0
          %1518 = vmatpush1.bf16.msra.mxu0 %v1508
          %1519 = vmatprep.subr.bf16.mxu0 0
          %1520 = vmatpush1.bf16.msra.mxu0 %v1507
          %1521 = vmatprep.subr.bf16.mxu0 0
          %1522 = vmatpush1.bf16.msra.mxu0 %v1506
          %1523 = vmatprep.subr.bf16.mxu0 0
          %1524 = vmatpush1.bf16.msra.mxu0 %v1505
          %1525 = vmatprep.subr.bf16.mxu0 0
          %1526 = vmatpush1.bf16.msra.mxu0 %v1504
          %1527 = vmatprep.subr.bf16.mxu0 0
          %1528 = vmatpush1.bf16.msra.mxu0 %v1503
          %1529 = vmatprep.subr.bf16.mxu0 0
          %1530 = vmatpush1.bf16.msra.mxu0 %v1502
          %1531 = vmatprep.subr.bf16.mxu0 0
          %1532 = vmatpush1.bf16.msra.mxu0 %v1501
          %1533 = vmatprep.subr.bf16.mxu0 0
          %1534 = vmatpush2.bf16.msra.mxu0 0
          %1535 = vmatprep.subr.bf16.mxu0 0
          %1536 = vmatpush2.bf16.msra.mxu0 0
          %1537 = vmatprep.subr.bf16.mxu0 0
          %1538 = vmatpush2.bf16.msra.mxu0 0
          %1539 = vmatprep.subr.bf16.mxu0 0
          %1540 = vmatpush2.bf16.msra.mxu0 0
          %1541 = vmatprep.subr.bf16.mxu0 0
          %1542 = vmatpush2.bf16.msra.mxu0 0
          %1543 = vmatprep.subr.bf16.mxu0 0
          %1544 = vmatpush2.bf16.msra.mxu0 0
          %1545 = vmatprep.subr.bf16.mxu0 0
          %1546 = vmatpush2.bf16.msra.mxu0 0
          %1547 = vmatprep.subr.bf16.mxu0 0
          %1548 = vmatpush2.bf16.msra.mxu0 0
          %1549 = vmatprep.mubr.bf16.mxu0 0
          %1550 = vmatmul.mubr.bf16.gmra.mxu0 %v1445
          %v1551 = vpop.f32.mrf.mxu0
          %v1552 = vadd.f32 %v1467, %v1551
          %v1553 = vpop.f32.mrf.mxu0
          %v1554 = vpop.f32.mrf.mxu0
          %v1555 = vpop.f32.mrf.mxu0
          %1556 = vdwg.mxu0
          %v1557 = vadd.f32 %v1338, %v1552
          %1558 = vst.msk [vmem:[%s495] sm:$0xff] %vm1341, %v1557
        $region76: #{_nanogpt_block_impl.3} parent=63 // pred_fallthru
          _
        %s1559 = sand.u32 %s321, 1
        %s1560 = scalar_lea.sflag [#allocation6], %s1559
        %s1561 = sand.u32 %s321, 1
        %s1562 = smul.addr %s1561, 8
        %s1563 = scalar_lea.vmem [#allocation5], %s1562
        // Predicated region
        $region77: #{_nanogpt_block_impl.3} parent=63 // pred_check
          %p1564 = pneg %p331
        $region78: #{_nanogpt_block_impl.3} parent=63 // pred_check_branch
          %1566 = sbr.rel (%p1564) target = $region80
        $region79: #{_nanogpt_block_impl.3} parent=63 // pred_region
          %s1568 = ssub.s32 128, 128
          %1569 = vsyncadd %s1560, %s1568
          %s1570 = sadd.s32 %s31, %s30
          %s1571 = smul.addr %s1570, 128
          %s1572 = scalar_lea.hbm %s11, %s1571
          %s1574 = sshll.u32 %s1563, 4
          %s1575 = int_to_ptr.vmem [resolvable:$true] %s1574
          %1577 = dma.vmem_to_hbm [thread:$0]  %s1575, 128, %s1572, %s1560
        $region80: #{_nanogpt_block_impl.3} parent=63 // pred_fallthru
          _
      $region64: #{_nanogpt_block_impl.3} parent=5 // pred_fallthru
        _
      %p1578 = scmp.le.s32.totalorder 2, %s20
      // Predicated region
      $region81: #{_nanogpt_block_impl.3} parent=5 // pred_check
        %p1579 = pneg %p1578
      $region82: #{_nanogpt_block_impl.3} parent=5 // pred_check_branch
        %1581 = sbr.rel (%p1579) target = $region84
      $region83: #{_nanogpt_block_impl.3} parent=5 // pred_region
        %s1582 = ssub.s32 %s20, 2
        // Predicated region
        $region85: #{_nanogpt_block_impl.3} parent=83 // pred_check
          %p1583 = pneg %p337
        $region86: #{_nanogpt_block_impl.3} parent=83 // pred_check_branch
          %1585 = sbr.rel (%p1583) target = $region88
        $region87: #{_nanogpt_block_impl.3} parent=83 // pred_region
          %s1586 = sand.u32 %s322, 1
          %s1587 = scalar_lea.sflag [#allocation6], %s1586
          %s1588 = sand.u32 %s322, 1
          %s1589 = smul.addr %s1588, 8
          %s1590 = scalar_lea.vmem [#allocation5], %s1589
          %1591 = dma.done %s1587, 128
        $region88: #{_nanogpt_block_impl.3} parent=83 // pred_fallthru
          _
      $region84: #{_nanogpt_block_impl.3} parent=5 // pred_fallthru
        _
    $region6: #{_nanogpt_block_impl.3} parent=1 // loop_footer
      %s24 = sadd.s32 1, %s20
    $region7: #{_nanogpt_block_impl.3} parent=1 // loop_footer_branch
      %19 = sbr.rel target = $region3
    $region8: #{_nanogpt_block_impl.3} parent=1 // loop_exit
      _
    %1592 = vsyncpa [#allocation6], 1
    %s1593 = scalar_lea.sflag [#allocation6], 1
    %1594 = vsyncpa %s1593, 1

</llo_original>
